<compile_context>
chip_gen: v5e
topology: v5e:2x2
jax: 0.10.0
libtpu: 0.0.40
codegen_flags: <defaults>
</compile_context>

<pallas_src>
import functools
import numpy as np
import jax
import jax.numpy as jnp
from jax import lax
from jax.experimental import pallas as pl
from jax.experimental.pallas import tpu as pltpu

# ---- static configuration (small shapes consistent with the module) ----
B = 8            # batch size (number of subject/object pairs)
E = 8            # num_experts
K = 2            # topk_training
SF_DIM = 36      # moe_input_size == subject/object feature dim
P_DIM = 132      # ppf / pvf (predicate) feature dim
OBJ_NUM = 36     # object_num   (expert s/o score dim)
PRED_NUM = 132   # predicate_num (expert p score dim)
H1, H2 = 72, 144     # SOCombinationNet: 36 -> 72 -> 144 -> 36
PH1, PH2 = 132, 264  # PCombinationNet: 132 -> 132 -> 264 -> 132
NOISE_EPS = 0.01
LOSS_COEF = 0.01
BIAS_W = max(H1, H2, OBJ_NUM, PH1, PH2, PRED_NUM)   # 264 (packed-bias row width)

# Perf-review item: flip to jnp.bfloat16 to cut MXU push count ~3x and halve weight
# DMA bytes (biggest win on v5e). Kept f32 by default to preserve reference numerics;
# gate a bf16 switch behind a tolerance test against this path.
EXPERT_COMPUTE_DTYPE = jnp.float32

_SQRT_HALF = 0.7071067811865476


def _vmem():
    return pl.BlockSpec(memory_space=pltpu.MemorySpace.VMEM)


def _softplus(x):
    # numerically-stable softplus from ops that lower cleanly on Mosaic
    return jnp.maximum(x, 0.0) + jnp.log(1.0 + jnp.exp(-jnp.abs(x)))


def _normal_cdf(x):
    # Phi(x) = 0.5*(1 + erf(x/sqrt(2))); erf via Abramowitz-Stegun 7.1.26, |err| < 1.5e-7.
    # TODO(synk): swap for lax.erf if/when it has a guaranteed Mosaic lowering.
    z = x * _SQRT_HALF
    az = jnp.abs(z)
    t = 1.0 / (1.0 + 0.3275911 * az)
    poly = t * (0.254829592 + t * (-0.284496736 + t * (1.421413741
             + t * (-1.453152027 + t * 1.061405429))))
    erf_abs = 1.0 - poly * jnp.exp(-az * az)
    erf_z = jnp.where(z < 0.0, -erf_abs, erf_abs)
    return 0.5 * (1.0 + erf_z)


# ---------------------------------------------------------------------------
# Fused kernel: noisy top-k gating + shared-weight expert MLPs + combine + aux loss
# ---------------------------------------------------------------------------
def fused_moe_kernel(so_in_ref, ppf_ref, pvf_ref, noise_ref,
                     wgn_ref, w1_ref, w2_ref, w3_ref,
                     p1_ref, p2_ref, p3_ref, bias_ref,
                     so_out_ref, p_out_ref, loss_ref, *, loss_coef):
    so = so_in_ref[...]                    # [2B, SF_DIM] = [sf ; of] (pre-stacked)
    sf = so[:B]                            # gating only looks at sf

    # ---- noisy gating: ONE fused MXU push gives clean + raw-noise logits ----
    g = jnp.dot(sf, wgn_ref[...], preferred_element_type=jnp.float32)   # [B, 2E]
    clean = g[:, :E]
    raw_noise = g[:, E:2 * E]
    std = _softplus(raw_noise) + NOISE_EPS            # * train (train=True -> *1)
    noisy = clean + noise_ref[...] * std

    # ---- iterative top-(K+1): K+1 rounds of (max, first-argmax one-hot, mask) ----
    iota = lax.broadcasted_iota(jnp.int32, (B, E), 1)
    work = noisy
    top_vals = []
    onehots = []
    for _ in range(K + 1):
        m = jnp.max(work, axis=1, keepdims=True)                        # [B,1]
        eq = work == m
        first = jnp.min(jnp.where(eq, iota, E), axis=1, keepdims=True)  # [B,1]
        oh = iota == first                                              # [B,E]
        top_vals.append(m)
        onehots.append(oh)
        work = jnp.where(oh, -jnp.inf, work)

    # ---- softmax over the top-K logits (top_vals[0] is the row max -> stable) ----
    e_top = [jnp.ones_like(top_vals[0])]          # exp(max - max) == 1: skip one EUP exp
    for j in range(1, K):
        e_top.append(jnp.exp(top_vals[j] - top_vals[0]))
    den = e_top[0]
    for j in range(1, K):
        den = den + e_top[j]
    inv_den = pl.reciprocal(den, approx=True)     # EUP slot, otherwise idle

    gates = jnp.zeros((B, E), jnp.float32)
    for j in range(K):
        gates = gates + jnp.where(onehots[j], e_top[j] * inv_den, 0.0)

    importance = jnp.sum(gates, axis=0, keepdims=True)                  # [1,E]
    # active experts per row (== K unless an exp() underflows, same as reference)
    count = jnp.sum((gates > 0.0).astype(jnp.float32), axis=1, keepdims=True)  # [B,1]
    log_count = jnp.log(count)

    # ---- experts (all experts share weights; biases arrive packed in one [6,264]) ----
    bp = bias_ref[...]
    b1, b2, b3 = bp[0:1, :H1], bp[1:2, :H2], bp[2:3, :OBJ_NUM]
    pb1, pb2, pb3 = bp[3:4, :PH1], bp[4:5, :PH2], bp[5:6, :PRED_NUM]

    cd = EXPERT_COMPUTE_DTYPE

    def mm(x, w_ref):
        return jnp.dot(x.astype(cd), w_ref[...].astype(cd),
                       preferred_element_type=jnp.float32)

    def mlp3(x, wa, ba, wb, bb, wc, bc):
        h = jnp.maximum(mm(x, wa) + ba, 0.0)
        h = jnp.maximum(mm(h, wb) + bb, 0.0)
        return jnp.maximum(mm(h, wc) + bc, 0.0)

    # sf and of go through the shared s/o expert together as [2B, SF_DIM]
    so_score = mlp3(so, w1_ref, b1, w2_ref, b2, w3_ref, b3)             # [2B, OBJ_NUM]
    p_in = ppf_ref[...] + pvf_ref[...]
    p_score = mlp3(p_in, p1_ref, pb1, p2_ref, pb2, p3_ref, pb3)         # [B, PRED_NUM]

    # ---- SparseDispatcher.combine (multiply_by_gates=False, shared experts) ----
    #   combined[b] = count[b] * exp(score[b])  ->  log(combined) = score + log(count)
    # (overflow-safe; reference eps floor unreachable: count >= 1, exp(score) >= 1)
    log_count_2b = jnp.concatenate([log_count, log_count], axis=0)      # [2B,1]
    so_out_ref[...] = so_score + log_count_2b
    p_out_ref[...] = p_score + log_count

    # ---- load-balancing auxiliary loss, fully in-kernel ----
    thr_in = top_vals[K]          # (k+1)-th largest noisy logit, [B,1]
    thr_out = top_vals[K - 1]     # k-th largest noisy logit, [B,1]
    is_in = noisy > thr_in
    prob_if_in = _normal_cdf((clean - thr_in) / std)
    prob_if_out = _normal_cdf((clean - thr_out) / std)
    load = jnp.sum(jnp.where(is_in, prob_if_in, prob_if_out),
                   axis=0, keepdims=True)                               # [1,E]

    def cv_squared(x):            # x: [1,E]; torch .var() is unbiased (ddof=1)
        mean = jnp.sum(x, axis=1, keepdims=True) * (1.0 / E)
        var = jnp.sum((x - mean) ** 2, axis=1, keepdims=True) * (1.0 / (E - 1))
        return var / (mean * mean + 1e-10)                              # [1,1]

    loss_ref[...] = (cv_squared(importance) + cv_squared(load)) * loss_coef


# ---------------------------------------------------------------------------
# Wrapper (forward pass): one fused pallas_call, no plain-JAX glue left
# ---------------------------------------------------------------------------
def moe_forward(sf, of, ppf, pvf, params, noise, loss_coef=LOSS_COEF):
    so_in = jnp.concatenate([sf, of], axis=0)            # [2B, SF_DIM], one operand

    operands = (so_in, ppf, pvf, noise,
                params["wgn"], params["w1"], params["w2"], params["w3"],
                params["p1"], params["p2"], params["p3"], params["bias_pack"])

    out_bytes = 4 * (2 * B * OBJ_NUM + B * PRED_NUM + 1)
    cost = pl.CostEstimate(
        flops=2 * (2 * B * (SF_DIM * H1 + H1 * H2 + H2 * OBJ_NUM)
                   + B * (P_DIM * PH1 + PH1 * PH2 + PH2 * PRED_NUM)
                   + B * SF_DIM * 2 * E),
        transcendentals=B * E * 3 + B * (K + 1),      # softplus/softmax/erf exps, logs
        bytes_accessed=sum(4 * a.size for a in operands) + out_bytes,
    )

    so_out, p_out, loss = pl.pallas_call(
        functools.partial(fused_moe_kernel, loss_coef=loss_coef),
        out_shape=(
            jax.ShapeDtypeStruct((2 * B, OBJ_NUM), jnp.float32),   # [s_score ; o_score]
            jax.ShapeDtypeStruct((B, PRED_NUM), jnp.float32),      # p_score
            jax.ShapeDtypeStruct((1, 1), jnp.float32),             # aux loss (scalar)
        ),
        in_specs=[_vmem()] * len(operands),
        out_specs=(_vmem(), _vmem(), _vmem()),
        cost_estimate=cost,
    )(*operands)

    s_score = so_out[:B]
    o_score = so_out[B:]
    return s_score, o_score, p_out, loss[0, 0]


# ---------------------------------------------------------------------------
# Deterministic parameter init (shapes from the module's __init__)
# ---------------------------------------------------------------------------
def init_params(key):
    def linear(k, fan_in, fan_out):
        bound = 1.0 / np.sqrt(fan_in)
        kw, kb = jax.random.split(k)
        w = jax.random.uniform(kw, (fan_in, fan_out), jnp.float32, -bound, bound)
        b = jax.random.uniform(kb, (fan_out,), jnp.float32, -bound, bound)
        return w, b

    keys = jax.random.split(key, 6)
    w1, b1 = linear(keys[0], SF_DIM, H1)       # SOCombinationNet: 36 -> 72 -> 144 -> 36
    w2, b2 = linear(keys[1], H1, H2)
    w3, b3 = linear(keys[2], H2, OBJ_NUM)
    p1, pb1 = linear(keys[3], P_DIM, PH1)      # PCombinationNet: 132 -> 132 -> 264 -> 132
    p2, pb2 = linear(keys[4], PH1, PH2)
    p3, pb3 = linear(keys[5], PH2, PRED_NUM)

    def pad_bias(b):
        return jnp.pad(b, (0, BIAS_W - b.shape[0]))
    bias_pack = jnp.stack([pad_bias(b) for b in (b1, b2, b3, pb1, pb2, pb3)], axis=0)

    return dict(
        # w_gate / w_noise are zero-initialized in IterativeMoE.__init__;
        # packed as one [SF_DIM, 2E] operand (lanes 0:E = gate, lanes E:2E = noise).
        wgn=jnp.zeros((SF_DIM, 2 * E), jnp.float32),
        w1=w1, w2=w2, w3=w3,
        p1=p1, p2=p2, p3=p3,
        bias_pack=bias_pack,
    )


if __name__ == "__main__":
    key = jax.random.PRNGKey(0)
    k_sf, k_of, k_ppf, k_pvf, k_noise, k_par = jax.random.split(key, 6)
    sf = jax.random.normal(k_sf, (B, SF_DIM), jnp.float32)
    of = jax.random.normal(k_of, (B, SF_DIM), jnp.float32)
    ppf = jax.random.normal(k_ppf, (B, P_DIM), jnp.float32)
    pvf = jax.random.normal(k_pvf, (B, P_DIM), jnp.float32)
    noise = jax.random.normal(k_noise, (B, E), jnp.float32)   # torch.randn_like analogue
    params = init_params(k_par)

    s_score, o_score, p_score, loss = jax.jit(moe_forward)(sf, of, ppf, pvf, params, noise)
    jax.block_until_ready((s_score, o_score, p_score, loss))

    assert s_score.shape == (B, OBJ_NUM)
    assert o_score.shape == (B, OBJ_NUM)
    assert p_score.shape == (B, PRED_NUM)
    assert loss.shape == ()
    assert bool(jnp.all(jnp.isfinite(s_score)))
    assert bool(jnp.all(jnp.isfinite(o_score)))
    assert bool(jnp.all(jnp.isfinite(p_score)))
    assert bool(jnp.isfinite(loss))
    print("KERNEL_OK")
</pallas_src>

<mosaic_0001>
module attributes {stable_mosaic.version = 11 : i64} {
  func.func @fused_moe_kernel(%arg0: memref<16x36xf32, #tpu.memory_space<vmem>>, %arg1: memref<8x132xf32, #tpu.memory_space<vmem>>, %arg2: memref<8x132xf32, #tpu.memory_space<vmem>>, %arg3: memref<8x8xf32, #tpu.memory_space<vmem>>, %arg4: memref<36x16xf32, #tpu.memory_space<vmem>>, %arg5: memref<36x72xf32, #tpu.memory_space<vmem>>, %arg6: memref<72x144xf32, #tpu.memory_space<vmem>>, %arg7: memref<144x36xf32, #tpu.memory_space<vmem>>, %arg8: memref<132x132xf32, #tpu.memory_space<vmem>>, %arg9: memref<132x264xf32, #tpu.memory_space<vmem>>, %arg10: memref<264x132xf32, #tpu.memory_space<vmem>>, %arg11: memref<6x264xf32, #tpu.memory_space<vmem>>, %arg12: memref<16x36xf32, #tpu.memory_space<vmem>>, %arg13: memref<8x132xf32, #tpu.memory_space<vmem>>, %arg14: memref<1x1xf32, #tpu.memory_space<vmem>>) attributes {dimension_semantics = [], scalar_prefetch = 0 : i64, scratch_operands = 0 : i64, tpu.core_type = #tpu.core_type<tc>} {
    %c0 = arith.constant 0 : index
    %c0_0 = arith.constant 0 : index
    %0 = vector.load %arg0[%c0, %c0_0] : memref<16x36xf32, #tpu.memory_space<vmem>>, vector<16x36xf32>
    %1 = vector.extract_strided_slice %0 {offsets = [0, 0], sizes = [8, 36], strides = [1, 1]} : vector<16x36xf32> to vector<8x36xf32>
    %c0_1 = arith.constant 0 : index
    %c0_2 = arith.constant 0 : index
    %2 = vector.load %arg4[%c0_1, %c0_2] : memref<36x16xf32, #tpu.memory_space<vmem>>, vector<36x16xf32>
    %cst = arith.constant dense<0.000000e+00> : vector<8x16xf32>
    %3 = tpu.matmul %1, %2, %cst {dimension_numbers = #tpu.dot_dimension_numbers<[1], [0], [0], [1], [0, 0, 1, 1], [], []>} : vector<8x36xf32>, vector<36x16xf32>, vector<8x16xf32> -> vector<8x16xf32>
    %4 = vector.extract_strided_slice %3 {offsets = [0, 0], sizes = [8, 8], strides = [1, 1]} : vector<8x16xf32> to vector<8x8xf32>
    %5 = vector.extract_strided_slice %3 {offsets = [0, 8], sizes = [8, 8], strides = [1, 1]} : vector<8x16xf32> to vector<8x8xf32>
    %cst_3 = arith.constant 0.000000e+00 : f32
    %6 = vector.broadcast %cst_3 : f32 to vector<8x8xf32>
    %7 = arith.maximumf %5, %6 : vector<8x8xf32>
    %8 = math.absf %5 : vector<8x8xf32>
    %cst_4 = arith.constant 0.000000e+00 : f32
    %9 = vector.broadcast %cst_4 : f32 to vector<8x8xf32>
    %10 = arith.subf %9, %8 : vector<8x8xf32>
    %11 = math.exp %10 : vector<8x8xf32>
    %cst_5 = arith.constant 1.000000e+00 : f32
    %12 = vector.broadcast %cst_5 : f32 to vector<8x8xf32>
    %13 = arith.addf %12, %11 : vector<8x8xf32>
    %14 = math.log %13 : vector<8x8xf32>
    %15 = arith.addf %7, %14 : vector<8x8xf32>
    %cst_6 = arith.constant 0.00999999977 : f32
    %16 = vector.broadcast %cst_6 : f32 to vector<8x8xf32>
    %17 = arith.addf %15, %16 : vector<8x8xf32>
    %c0_7 = arith.constant 0 : index
    %c0_8 = arith.constant 0 : index
    %18 = vector.load %arg3[%c0_7, %c0_8] : memref<8x8xf32, #tpu.memory_space<vmem>>, vector<8x8xf32>
    %19 = arith.mulf %18, %17 : vector<8x8xf32>
    %20 = arith.addf %4, %19 : vector<8x8xf32>
    %21 = tpu.iota {dimensions = array<i32: 1>} : vector<8x8xi32>
    %cst_9 = arith.constant dense<0xFF800000> : vector<8xf32>
    %22 = vector.multi_reduction <maximumf>, %20, %cst_9 [1] : vector<8x8xf32> to vector<8xf32>
    %23 = vector.shape_cast %22 : vector<8xf32> to vector<8x1xf32>
    %24 = vector.broadcast %23 : vector<8x1xf32> to vector<8x8xf32>
    %25 = arith.cmpf oeq, %20, %24 : vector<8x8xf32>
    %c8_i32 = arith.constant 8 : i32
    %26 = vector.broadcast %c8_i32 : i32 to vector<8x8xi32>
    %27 = arith.select %25, %21, %26 : vector<8x8xi1>, vector<8x8xi32>
    %cst_10 = arith.constant dense<2147483647> : vector<8xi32>
    %28 = vector.multi_reduction <minsi>, %27, %cst_10 [1] : vector<8x8xi32> to vector<8xi32>
    %29 = vector.shape_cast %28 : vector<8xi32> to vector<8x1xi32>
    %30 = vector.broadcast %29 : vector<8x1xi32> to vector<8x8xi32>
    %31 = arith.cmpi eq, %21, %30 : vector<8x8xi32>
    %cst_11 = arith.constant 0xFF800000 : f32
    %32 = vector.broadcast %cst_11 : f32 to vector<8x8xf32>
    %33 = arith.select %31, %32, %20 : vector<8x8xi1>, vector<8x8xf32>
    %cst_12 = arith.constant dense<0xFF800000> : vector<8xf32>
    %34 = vector.multi_reduction <maximumf>, %33, %cst_12 [1] : vector<8x8xf32> to vector<8xf32>
    %35 = vector.shape_cast %34 : vector<8xf32> to vector<8x1xf32>
    %36 = vector.broadcast %35 : vector<8x1xf32> to vector<8x8xf32>
    %37 = arith.cmpf oeq, %33, %36 : vector<8x8xf32>
    %c8_i32_13 = arith.constant 8 : i32
    %38 = vector.broadcast %c8_i32_13 : i32 to vector<8x8xi32>
    %39 = arith.select %37, %21, %38 : vector<8x8xi1>, vector<8x8xi32>
    %cst_14 = arith.constant dense<2147483647> : vector<8xi32>
    %40 = vector.multi_reduction <minsi>, %39, %cst_14 [1] : vector<8x8xi32> to vector<8xi32>
    %41 = vector.shape_cast %40 : vector<8xi32> to vector<8x1xi32>
    %42 = vector.broadcast %41 : vector<8x1xi32> to vector<8x8xi32>
    %43 = arith.cmpi eq, %21, %42 : vector<8x8xi32>
    %cst_15 = arith.constant 0xFF800000 : f32
    %44 = vector.broadcast %cst_15 : f32 to vector<8x8xf32>
    %45 = arith.select %43, %44, %33 : vector<8x8xi1>, vector<8x8xf32>
    %cst_16 = arith.constant dense<0xFF800000> : vector<8xf32>
    %46 = vector.multi_reduction <maximumf>, %45, %cst_16 [1] : vector<8x8xf32> to vector<8xf32>
    %47 = vector.shape_cast %46 : vector<8xf32> to vector<8x1xf32>
    %cst_17 = arith.constant 1.000000e+00 : f32
    %48 = vector.broadcast %cst_17 : f32 to vector<8x1xf32>
    %49 = arith.subf %35, %23 : vector<8x1xf32>
    %50 = math.exp %49 : vector<8x1xf32>
    %51 = arith.addf %48, %50 : vector<8x1xf32>
    %52 = tpu.reciprocal %51 {approx = true} : vector<8x1xf32> -> vector<8x1xf32>
    %cst_18 = arith.constant 0.000000e+00 : f32
    %53 = vector.broadcast %cst_18 : f32 to vector<8x8xf32>
    %54 = arith.mulf %48, %52 : vector<8x1xf32>
    %cst_19 = arith.constant 0.000000e+00 : f32
    %55 = vector.shape_cast %54 : vector<8x1xf32> to vector<8x1xf32>
    %56 = vector.broadcast %55 : vector<8x1xf32> to vector<8x8xf32>
    %57 = vector.broadcast %cst_19 : f32 to vector<8x8xf32>
    %58 = arith.select %31, %56, %57 : vector<8x8xi1>, vector<8x8xf32>
    %59 = arith.addf %53, %58 : vector<8x8xf32>
    %60 = arith.mulf %50, %52 : vector<8x1xf32>
    %cst_20 = arith.constant 0.000000e+00 : f32
    %61 = vector.shape_cast %60 : vector<8x1xf32> to vector<8x1xf32>
    %62 = vector.broadcast %61 : vector<8x1xf32> to vector<8x8xf32>
    %63 = vector.broadcast %cst_20 : f32 to vector<8x8xf32>
    %64 = arith.select %43, %62, %63 : vector<8x8xi1>, vector<8x8xf32>
    %65 = arith.addf %59, %64 : vector<8x8xf32>
    %cst_21 = arith.constant dense<0.000000e+00> : vector<8xf32>
    %66 = vector.multi_reduction <add>, %65, %cst_21 [0] : vector<8x8xf32> to vector<8xf32>
    %67 = vector.shape_cast %66 : vector<8xf32> to vector<1x8xf32>
    %cst_22 = arith.constant 0.000000e+00 : f32
    %68 = vector.broadcast %cst_22 : f32 to vector<8x8xf32>
    %69 = arith.cmpf ogt, %65, %68 : vector<8x8xf32>
    %70 = arith.extui %69 : vector<8x8xi1> to vector<8x8xi32>
    %71 = arith.sitofp %70 : vector<8x8xi32> to vector<8x8xf32>
    %cst_23 = arith.constant dense<0.000000e+00> : vector<8xf32>
    %72 = vector.multi_reduction <add>, %71, %cst_23 [1] : vector<8x8xf32> to vector<8xf32>
    %73 = vector.shape_cast %72 : vector<8xf32> to vector<8x1xf32>
    %74 = math.log %73 : vector<8x1xf32>
    %c0_24 = arith.constant 0 : index
    %c0_25 = arith.constant 0 : index
    %75 = vector.load %arg11[%c0_24, %c0_25] : memref<6x264xf32, #tpu.memory_space<vmem>>, vector<6x264xf32>
    %76 = vector.extract_strided_slice %75 {offsets = [0, 0], sizes = [1, 72], strides = [1, 1]} : vector<6x264xf32> to vector<1x72xf32>
    %77 = vector.extract_strided_slice %75 {offsets = [1, 0], sizes = [1, 144], strides = [1, 1]} : vector<6x264xf32> to vector<1x144xf32>
    %78 = vector.extract_strided_slice %75 {offsets = [2, 0], sizes = [1, 36], strides = [1, 1]} : vector<6x264xf32> to vector<1x36xf32>
    %79 = vector.extract_strided_slice %75 {offsets = [3, 0], sizes = [1, 132], strides = [1, 1]} : vector<6x264xf32> to vector<1x132xf32>
    %80 = vector.extract_strided_slice %75 {offsets = [4, 0], sizes = [1, 264], strides = [1, 1]} : vector<6x264xf32> to vector<1x264xf32>
    %81 = vector.extract_strided_slice %75 {offsets = [5, 0], sizes = [1, 132], strides = [1, 1]} : vector<6x264xf32> to vector<1x132xf32>
    %c0_26 = arith.constant 0 : index
    %c0_27 = arith.constant 0 : index
    %82 = vector.load %arg5[%c0_26, %c0_27] : memref<36x72xf32, #tpu.memory_space<vmem>>, vector<36x72xf32>
    %cst_28 = arith.constant dense<0.000000e+00> : vector<16x72xf32>
    %83 = tpu.matmul %0, %82, %cst_28 {dimension_numbers = #tpu.dot_dimension_numbers<[1], [0], [0], [1], [0, 0, 1, 1], [], []>} : vector<16x36xf32>, vector<36x72xf32>, vector<16x72xf32> -> vector<16x72xf32>
    %84 = vector.broadcast %76 : vector<1x72xf32> to vector<16x72xf32>
    %85 = arith.addf %83, %84 : vector<16x72xf32>
    %cst_29 = arith.constant 0.000000e+00 : f32
    %86 = vector.broadcast %cst_29 : f32 to vector<16x72xf32>
    %87 = arith.maximumf %85, %86 : vector<16x72xf32>
    %c0_30 = arith.constant 0 : index
    %c0_31 = arith.constant 0 : index
    %88 = vector.load %arg6[%c0_30, %c0_31] : memref<72x144xf32, #tpu.memory_space<vmem>>, vector<72x144xf32>
    %cst_32 = arith.constant dense<0.000000e+00> : vector<16x144xf32>
    %89 = tpu.matmul %87, %88, %cst_32 {dimension_numbers = #tpu.dot_dimension_numbers<[1], [0], [0], [1], [0, 0, 1, 1], [], []>} : vector<16x72xf32>, vector<72x144xf32>, vector<16x144xf32> -> vector<16x144xf32>
    %90 = vector.broadcast %77 : vector<1x144xf32> to vector<16x144xf32>
    %91 = arith.addf %89, %90 : vector<16x144xf32>
    %cst_33 = arith.constant 0.000000e+00 : f32
    %92 = vector.broadcast %cst_33 : f32 to vector<16x144xf32>
    %93 = arith.maximumf %91, %92 : vector<16x144xf32>
    %c0_34 = arith.constant 0 : index
    %c0_35 = arith.constant 0 : index
    %94 = vector.load %arg7[%c0_34, %c0_35] : memref<144x36xf32, #tpu.memory_space<vmem>>, vector<144x36xf32>
    %cst_36 = arith.constant dense<0.000000e+00> : vector<16x36xf32>
    %95 = tpu.matmul %93, %94, %cst_36 {dimension_numbers = #tpu.dot_dimension_numbers<[1], [0], [0], [1], [0, 0, 1, 1], [], []>} : vector<16x144xf32>, vector<144x36xf32>, vector<16x36xf32> -> vector<16x36xf32>
    %96 = vector.broadcast %78 : vector<1x36xf32> to vector<16x36xf32>
    %97 = arith.addf %95, %96 : vector<16x36xf32>
    %cst_37 = arith.constant 0.000000e+00 : f32
    %98 = vector.broadcast %cst_37 : f32 to vector<16x36xf32>
    %99 = arith.maximumf %97, %98 : vector<16x36xf32>
    %c0_38 = arith.constant 0 : index
    %c0_39 = arith.constant 0 : index
    %100 = vector.load %arg1[%c0_38, %c0_39] : memref<8x132xf32, #tpu.memory_space<vmem>>, vector<8x132xf32>
    %c0_40 = arith.constant 0 : index
    %c0_41 = arith.constant 0 : index
    %101 = vector.load %arg2[%c0_40, %c0_41] : memref<8x132xf32, #tpu.memory_space<vmem>>, vector<8x132xf32>
    %102 = arith.addf %100, %101 : vector<8x132xf32>
    %c0_42 = arith.constant 0 : index
    %c0_43 = arith.constant 0 : index
    %103 = vector.load %arg8[%c0_42, %c0_43] : memref<132x132xf32, #tpu.memory_space<vmem>>, vector<132x132xf32>
    %cst_44 = arith.constant dense<0.000000e+00> : vector<8x132xf32>
    %104 = tpu.matmul %102, %103, %cst_44 {dimension_numbers = #tpu.dot_dimension_numbers<[1], [0], [0], [1], [0, 0, 1, 1], [], []>} : vector<8x132xf32>, vector<132x132xf32>, vector<8x132xf32> -> vector<8x132xf32>
    %105 = vector.broadcast %79 : vector<1x132xf32> to vector<8x132xf32>
    %106 = arith.addf %104, %105 : vector<8x132xf32>
    %cst_45 = arith.constant 0.000000e+00 : f32
    %107 = vector.broadcast %cst_45 : f32 to vector<8x132xf32>
    %108 = arith.maximumf %106, %107 : vector<8x132xf32>
    %c0_46 = arith.constant 0 : index
    %c0_47 = arith.constant 0 : index
    %109 = vector.load %arg9[%c0_46, %c0_47] : memref<132x264xf32, #tpu.memory_space<vmem>>, vector<132x264xf32>
    %cst_48 = arith.constant dense<0.000000e+00> : vector<8x264xf32>
    %110 = tpu.matmul %108, %109, %cst_48 {dimension_numbers = #tpu.dot_dimension_numbers<[1], [0], [0], [1], [0, 0, 1, 1], [], []>} : vector<8x132xf32>, vector<132x264xf32>, vector<8x264xf32> -> vector<8x264xf32>
    %111 = vector.broadcast %80 : vector<1x264xf32> to vector<8x264xf32>
    %112 = arith.addf %110, %111 : vector<8x264xf32>
    %cst_49 = arith.constant 0.000000e+00 : f32
    %113 = vector.broadcast %cst_49 : f32 to vector<8x264xf32>
    %114 = arith.maximumf %112, %113 : vector<8x264xf32>
    %c0_50 = arith.constant 0 : index
    %c0_51 = arith.constant 0 : index
    %115 = vector.load %arg10[%c0_50, %c0_51] : memref<264x132xf32, #tpu.memory_space<vmem>>, vector<264x132xf32>
    %cst_52 = arith.constant dense<0.000000e+00> : vector<8x132xf32>
    %116 = tpu.matmul %114, %115, %cst_52 {dimension_numbers = #tpu.dot_dimension_numbers<[1], [0], [0], [1], [0, 0, 1, 1], [], []>} : vector<8x264xf32>, vector<264x132xf32>, vector<8x132xf32> -> vector<8x132xf32>
    %117 = vector.broadcast %81 : vector<1x132xf32> to vector<8x132xf32>
    %118 = arith.addf %116, %117 : vector<8x132xf32>
    %cst_53 = arith.constant 0.000000e+00 : f32
    %119 = vector.broadcast %cst_53 : f32 to vector<8x132xf32>
    %120 = arith.maximumf %118, %119 : vector<8x132xf32>
    %121 = tpu.concatenate %74, %74 in 0 : vector<8x1xf32>, vector<8x1xf32> -> vector<16x1xf32>
    %122 = vector.broadcast %121 : vector<16x1xf32> to vector<16x36xf32>
    %123 = arith.addf %99, %122 : vector<16x36xf32>
    %c0_54 = arith.constant 0 : index
    %c0_55 = arith.constant 0 : index
    %124 = vector.load %arg12[%c0_54, %c0_55] : memref<16x36xf32, #tpu.memory_space<vmem>>, vector<16x36xf32>
    tpu.vector_store %arg12[%c0_54, %c0_55], %123 {strides = array<i32>} : memref<16x36xf32, #tpu.memory_space<vmem>>, vector<16x36xf32>,
    %125 = vector.broadcast %74 : vector<8x1xf32> to vector<8x132xf32>
    %126 = arith.addf %120, %125 : vector<8x132xf32>
    %c0_56 = arith.constant 0 : index
    %c0_57 = arith.constant 0 : index
    %127 = vector.load %arg13[%c0_56, %c0_57] : memref<8x132xf32, #tpu.memory_space<vmem>>, vector<8x132xf32>
    tpu.vector_store %arg13[%c0_56, %c0_57], %126 {strides = array<i32>} : memref<8x132xf32, #tpu.memory_space<vmem>>, vector<8x132xf32>,
    %128 = vector.broadcast %47 : vector<8x1xf32> to vector<8x8xf32>
    %129 = arith.cmpf ogt, %20, %128 : vector<8x8xf32>
    %130 = vector.broadcast %47 : vector<8x1xf32> to vector<8x8xf32>
    %131 = arith.subf %4, %130 : vector<8x8xf32>
    %132 = arith.divf %131, %17 : vector<8x8xf32>
    %cst_58 = arith.constant 0.707106769 : f32
    %133 = vector.broadcast %cst_58 : f32 to vector<8x8xf32>
    %134 = arith.mulf %132, %133 : vector<8x8xf32>
    %135 = math.absf %134 : vector<8x8xf32>
    %cst_59 = arith.constant 0.327591091 : f32
    %136 = vector.broadcast %cst_59 : f32 to vector<8x8xf32>
    %137 = arith.mulf %136, %135 : vector<8x8xf32>
    %cst_60 = arith.constant 1.000000e+00 : f32
    %138 = vector.broadcast %cst_60 : f32 to vector<8x8xf32>
    %139 = arith.addf %138, %137 : vector<8x8xf32>
    %cst_61 = arith.constant 1.000000e+00 : f32
    %140 = vector.broadcast %cst_61 : f32 to vector<8x8xf32>
    %141 = arith.divf %140, %139 : vector<8x8xf32>
    %cst_62 = arith.constant 1.06140542 : f32
    %142 = vector.broadcast %cst_62 : f32 to vector<8x8xf32>
    %143 = arith.mulf %141, %142 : vector<8x8xf32>
    %cst_63 = arith.constant -1.45315206 : f32
    %144 = vector.broadcast %cst_63 : f32 to vector<8x8xf32>
    %145 = arith.addf %144, %143 : vector<8x8xf32>
    %146 = arith.mulf %141, %145 : vector<8x8xf32>
    %cst_64 = arith.constant 1.42141378 : f32
    %147 = vector.broadcast %cst_64 : f32 to vector<8x8xf32>
    %148 = arith.addf %147, %146 : vector<8x8xf32>
    %149 = arith.mulf %141, %148 : vector<8x8xf32>
    %cst_65 = arith.constant -0.284496725 : f32
    %150 = vector.broadcast %cst_65 : f32 to vector<8x8xf32>
    %151 = arith.addf %150, %149 : vector<8x8xf32>
    %152 = arith.mulf %141, %151 : vector<8x8xf32>
    %cst_66 = arith.constant 0.254829586 : f32
    %153 = vector.broadcast %cst_66 : f32 to vector<8x8xf32>
    %154 = arith.addf %153, %152 : vector<8x8xf32>
    %155 = arith.mulf %141, %154 : vector<8x8xf32>
    %cst_67 = arith.constant 0.000000e+00 : f32
    %156 = vector.broadcast %cst_67 : f32 to vector<8x8xf32>
    %157 = arith.subf %156, %135 : vector<8x8xf32>
    %158 = arith.mulf %157, %135 : vector<8x8xf32>
    %159 = math.exp %158 : vector<8x8xf32>
    %160 = arith.mulf %155, %159 : vector<8x8xf32>
    %cst_68 = arith.constant 1.000000e+00 : f32
    %161 = vector.broadcast %cst_68 : f32 to vector<8x8xf32>
    %162 = arith.subf %161, %160 : vector<8x8xf32>
    %cst_69 = arith.constant 0.000000e+00 : f32
    %163 = vector.broadcast %cst_69 : f32 to vector<8x8xf32>
    %164 = arith.cmpf olt, %134, %163 : vector<8x8xf32>
    %cst_70 = arith.constant 0.000000e+00 : f32
    %165 = vector.broadcast %cst_70 : f32 to vector<8x8xf32>
    %166 = arith.subf %165, %162 : vector<8x8xf32>
    %167 = arith.select %164, %166, %162 : vector<8x8xi1>, vector<8x8xf32>
    %cst_71 = arith.constant 1.000000e+00 : f32
    %168 = vector.broadcast %cst_71 : f32 to vector<8x8xf32>
    %169 = arith.addf %168, %167 : vector<8x8xf32>
    %cst_72 = arith.constant 5.000000e-01 : f32
    %170 = vector.broadcast %cst_72 : f32 to vector<8x8xf32>
    %171 = arith.mulf %170, %169 : vector<8x8xf32>
    %172 = vector.broadcast %35 : vector<8x1xf32> to vector<8x8xf32>
    %173 = arith.subf %4, %172 : vector<8x8xf32>
    %174 = arith.divf %173, %17 : vector<8x8xf32>
    %cst_73 = arith.constant 0.707106769 : f32
    %175 = vector.broadcast %cst_73 : f32 to vector<8x8xf32>
    %176 = arith.mulf %174, %175 : vector<8x8xf32>
    %177 = math.absf %176 : vector<8x8xf32>
    %cst_74 = arith.constant 0.327591091 : f32
    %178 = vector.broadcast %cst_74 : f32 to vector<8x8xf32>
    %179 = arith.mulf %178, %177 : vector<8x8xf32>
    %cst_75 = arith.constant 1.000000e+00 : f32
    %180 = vector.broadcast %cst_75 : f32 to vector<8x8xf32>
    %181 = arith.addf %180, %179 : vector<8x8xf32>
    %cst_76 = arith.constant 1.000000e+00 : f32
    %182 = vector.broadcast %cst_76 : f32 to vector<8x8xf32>
    %183 = arith.divf %182, %181 : vector<8x8xf32>
    %cst_77 = arith.constant 1.06140542 : f32
    %184 = vector.broadcast %cst_77 : f32 to vector<8x8xf32>
    %185 = arith.mulf %183, %184 : vector<8x8xf32>
    %cst_78 = arith.constant -1.45315206 : f32
    %186 = vector.broadcast %cst_78 : f32 to vector<8x8xf32>
    %187 = arith.addf %186, %185 : vector<8x8xf32>
    %188 = arith.mulf %183, %187 : vector<8x8xf32>
    %cst_79 = arith.constant 1.42141378 : f32
    %189 = vector.broadcast %cst_79 : f32 to vector<8x8xf32>
    %190 = arith.addf %189, %188 : vector<8x8xf32>
    %191 = arith.mulf %183, %190 : vector<8x8xf32>
    %cst_80 = arith.constant -0.284496725 : f32
    %192 = vector.broadcast %cst_80 : f32 to vector<8x8xf32>
    %193 = arith.addf %192, %191 : vector<8x8xf32>
    %194 = arith.mulf %183, %193 : vector<8x8xf32>
    %cst_81 = arith.constant 0.254829586 : f32
    %195 = vector.broadcast %cst_81 : f32 to vector<8x8xf32>
    %196 = arith.addf %195, %194 : vector<8x8xf32>
    %197 = arith.mulf %183, %196 : vector<8x8xf32>
    %cst_82 = arith.constant 0.000000e+00 : f32
    %198 = vector.broadcast %cst_82 : f32 to vector<8x8xf32>
    %199 = arith.subf %198, %177 : vector<8x8xf32>
    %200 = arith.mulf %199, %177 : vector<8x8xf32>
    %201 = math.exp %200 : vector<8x8xf32>
    %202 = arith.mulf %197, %201 : vector<8x8xf32>
    %cst_83 = arith.constant 1.000000e+00 : f32
    %203 = vector.broadcast %cst_83 : f32 to vector<8x8xf32>
    %204 = arith.subf %203, %202 : vector<8x8xf32>
    %cst_84 = arith.constant 0.000000e+00 : f32
    %205 = vector.broadcast %cst_84 : f32 to vector<8x8xf32>
    %206 = arith.cmpf olt, %176, %205 : vector<8x8xf32>
    %cst_85 = arith.constant 0.000000e+00 : f32
    %207 = vector.broadcast %cst_85 : f32 to vector<8x8xf32>
    %208 = arith.subf %207, %204 : vector<8x8xf32>
    %209 = arith.select %206, %208, %204 : vector<8x8xi1>, vector<8x8xf32>
    %cst_86 = arith.constant 1.000000e+00 : f32
    %210 = vector.broadcast %cst_86 : f32 to vector<8x8xf32>
    %211 = arith.addf %210, %209 : vector<8x8xf32>
    %cst_87 = arith.constant 5.000000e-01 : f32
    %212 = vector.broadcast %cst_87 : f32 to vector<8x8xf32>
    %213 = arith.mulf %212, %211 : vector<8x8xf32>
    %214 = arith.select %129, %171, %213 : vector<8x8xi1>, vector<8x8xf32>
    %cst_88 = arith.constant dense<0.000000e+00> : vector<8xf32>
    %215 = vector.multi_reduction <add>, %214, %cst_88 [0] : vector<8x8xf32> to vector<8xf32>
    %216 = vector.shape_cast %215 : vector<8xf32> to vector<1x8xf32>
    %cst_89 = arith.constant dense<0.000000e+00> : vector<1xf32>
    %217 = vector.multi_reduction <add>, %67, %cst_89 [1] : vector<1x8xf32> to vector<1xf32>
    %218 = vector.shape_cast %217 : vector<1xf32> to vector<1x1xf32>
    %cst_90 = arith.constant 1.250000e-01 : f32
    %219 = vector.broadcast %cst_90 : f32 to vector<1x1xf32>
    %220 = arith.mulf %218, %219 : vector<1x1xf32>
    %221 = vector.broadcast %220 : vector<1x1xf32> to vector<1x8xf32>
    %222 = arith.subf %67, %221 : vector<1x8xf32>
    %223 = arith.mulf %222, %222 : vector<1x8xf32>
    %cst_91 = arith.constant dense<0.000000e+00> : vector<1xf32>
    %224 = vector.multi_reduction <add>, %223, %cst_91 [1] : vector<1x8xf32> to vector<1xf32>
    %225 = vector.shape_cast %224 : vector<1xf32> to vector<1x1xf32>
    %cst_92 = arith.constant 0.142857149 : f32
    %226 = vector.broadcast %cst_92 : f32 to vector<1x1xf32>
    %227 = arith.mulf %225, %226 : vector<1x1xf32>
    %228 = arith.mulf %220, %220 : vector<1x1xf32>
    %cst_93 = arith.constant 1.000000e-10 : f32
    %229 = vector.broadcast %cst_93 : f32 to vector<1x1xf32>
    %230 = arith.addf %228, %229 : vector<1x1xf32>
    %231 = arith.divf %227, %230 : vector<1x1xf32>
    %cst_94 = arith.constant dense<0.000000e+00> : vector<1xf32>
    %232 = vector.multi_reduction <add>, %216, %cst_94 [1] : vector<1x8xf32> to vector<1xf32>
    %233 = vector.shape_cast %232 : vector<1xf32> to vector<1x1xf32>
    %cst_95 = arith.constant 1.250000e-01 : f32
    %234 = vector.broadcast %cst_95 : f32 to vector<1x1xf32>
    %235 = arith.mulf %233, %234 : vector<1x1xf32>
    %236 = vector.broadcast %235 : vector<1x1xf32> to vector<1x8xf32>
    %237 = arith.subf %216, %236 : vector<1x8xf32>
    %238 = arith.mulf %237, %237 : vector<1x8xf32>
    %cst_96 = arith.constant dense<0.000000e+00> : vector<1xf32>
    %239 = vector.multi_reduction <add>, %238, %cst_96 [1] : vector<1x8xf32> to vector<1xf32>
    %240 = vector.shape_cast %239 : vector<1xf32> to vector<1x1xf32>
    %cst_97 = arith.constant 0.142857149 : f32
    %241 = vector.broadcast %cst_97 : f32 to vector<1x1xf32>
    %242 = arith.mulf %240, %241 : vector<1x1xf32>
    %243 = arith.mulf %235, %235 : vector<1x1xf32>
    %cst_98 = arith.constant 1.000000e-10 : f32
    %244 = vector.broadcast %cst_98 : f32 to vector<1x1xf32>
    %245 = arith.addf %243, %244 : vector<1x1xf32>
    %246 = arith.divf %242, %245 : vector<1x1xf32>
    %247 = arith.addf %231, %246 : vector<1x1xf32>
    %cst_99 = arith.constant 0.00999999977 : f32
    %248 = vector.broadcast %cst_99 : f32 to vector<1x1xf32>
    %249 = arith.mulf %247, %248 : vector<1x1xf32>
    %c0_100 = arith.constant 0 : index
    %c0_101 = arith.constant 0 : index
    %250 = vector.load %arg14[%c0_100, %c0_101] : memref<1x1xf32, #tpu.memory_space<vmem>>, vector<1x1xf32>
    tpu.vector_store %arg14[%c0_100, %c0_101], %249 {strides = array<i32>} : memref<1x1xf32, #tpu.memory_space<vmem>>, vector<1x1xf32>,
    return
  }
}

</mosaic_0001>

<llo_original>
// kernel: moe_forward.1
$region0: #{moe_forward.1}
  #allocation0 [shape = 'u32[]', space=smem, size = 0x4, offset = 0x4, fixed_abs, tag = 'smem constant byte address 0x4 - core index']
  #allocation1 [shape = 'u32[72,128]{1,0:T(1,128)}', space=vmem, size = 0x9000, scoped, tag = 'internal scratch']
  %s0 = inlined_call_operand.vmem [shape: f32[16,36], index: 0, kind: input, shape index: {}]
  %s1 = inlined_call_operand.vmem [shape: f32[8,132], index: 1, kind: input, shape index: {}]
  %s2 = inlined_call_operand.vmem [shape: f32[8,132], index: 2, kind: input, shape index: {}]
  %s3 = inlined_call_operand.vmem [shape: f32[8,8], index: 3, kind: input, shape index: {}]
  %s4 = inlined_call_operand.vmem [shape: f32[36,16], index: 4, kind: input, shape index: {}]
  %s5 = inlined_call_operand.vmem [shape: f32[36,72], index: 5, kind: input, shape index: {}]
  %s6 = inlined_call_operand.vmem [shape: f32[72,144], index: 6, kind: input, shape index: {}]
  %s7 = inlined_call_operand.vmem [shape: f32[144,36], index: 7, kind: input, shape index: {}]
  %s8 = inlined_call_operand.vmem [shape: f32[132,132], index: 8, kind: input, shape index: {}]
  %s9 = inlined_call_operand.vmem [shape: f32[132,264], index: 9, kind: input, shape index: {}]
  %s10 = inlined_call_operand.vmem [shape: f32[264,132], index: 10, kind: input, shape index: {}]
  %s11 = inlined_call_operand.vmem [shape: f32[6,264], index: 11, kind: input, shape index: {}]
  %s12 = inlined_call_operand.vmem [shape: f32[16,36], index: 12, kind: output, shape index: {0}]
  %s13 = inlined_call_operand.hbm [shape: f32[8,132], index: 13, kind: output, shape index: {1}]
  %s14 = inlined_call_operand.hbm [shape: f32[1,1], index: 14, kind: output, shape index: {2}]
  %15 = xla_tuple %s12, %s13, %s14
  %s16 = sld [smem:[#allocation0]]
  $region74: #{moe_forward.1} parent=0
    _
  %s18 = ssub.s32 1, %s16
  %s19 = scalar_select 0, %s18, %s16
  $region1: #{moe_forward.1} parent=0
    #allocation2 [shape = 'u8[8192]{0}', space=vmem, size = 0x2000, scoped, tag = 'output window, operand 1, single buffered']
    #allocation3 [shape = 's32[1]{0}', space=sflag, size = 0x4, scoped, tag = 'scoped memory for moe_forward.1']
    #allocation4 [shape = 'u8[512]{0}', space=vmem, size = 0x400, scoped, tag = 'output window, operand 2, single buffered']
    #allocation5 [shape = 's32[1]{0}', space=sflag, size = 0x4, scoped, tag = 'scoped memory for moe_forward.1']
    %20 = vsyncpa [#allocation3], 0
    %21 = vsyncpa [#allocation5], 0
    // Predicated region
    $region2: #{moe_forward.1} parent=1 // pred_check
      _
    $region3: #{moe_forward.1} parent=1 // pred_check_branch
      %23 = sbr.rel (0) target = $region5
    $region4: #{moe_forward.1} parent=1 // pred_region
      _
    $region5: #{moe_forward.1} parent=1 // pred_fallthru
      _
    // Predicated region
    $region6: #{moe_forward.1} parent=1 // pred_check
      _
    $region7: #{moe_forward.1} parent=1 // pred_check_branch
      %25 = sbr.rel (0) target = $region9
    $region8: #{moe_forward.1} parent=1 // pred_region
      _
    $region9: #{moe_forward.1} parent=1 // pred_fallthru
      _
    // Predicated region
    $region10: #{moe_forward.1} parent=1 // pred_check
      _
    $region11: #{moe_forward.1} parent=1 // pred_check_branch
      %27 = sbr.rel (0) target = $region13
    $region12: #{moe_forward.1} parent=1 // pred_region
      _
    $region13: #{moe_forward.1} parent=1 // pred_fallthru
      _
    // Predicated region
    $region14: #{moe_forward.1} parent=1 // pred_check
      _
    $region15: #{moe_forward.1} parent=1 // pred_check_branch
      %29 = sbr.rel (0) target = $region17
    $region16: #{moe_forward.1} parent=1 // pred_region
      _
    $region17: #{moe_forward.1} parent=1 // pred_fallthru
      _
    // Predicated region
    $region18: #{moe_forward.1} parent=1 // pred_check
      _
    $region19: #{moe_forward.1} parent=1 // pred_check_branch
      %31 = sbr.rel (0) target = $region21
    $region20: #{moe_forward.1} parent=1 // pred_region
      _
    $region21: #{moe_forward.1} parent=1 // pred_fallthru
      _
    // Predicated region
    $region22: #{moe_forward.1} parent=1 // pred_check
      _
    $region23: #{moe_forward.1} parent=1 // pred_check_branch
      %33 = sbr.rel (0) target = $region25
    $region24: #{moe_forward.1} parent=1 // pred_region
      _
    $region25: #{moe_forward.1} parent=1 // pred_fallthru
      _
    // Predicated region
    $region26: #{moe_forward.1} parent=1 // pred_check
      _
    $region27: #{moe_forward.1} parent=1 // pred_check_branch
      %35 = sbr.rel (0) target = $region29
    $region28: #{moe_forward.1} parent=1 // pred_region
      _
    $region29: #{moe_forward.1} parent=1 // pred_fallthru
      _
    // Predicated region
    $region30: #{moe_forward.1} parent=1 // pred_check
      _
    $region31: #{moe_forward.1} parent=1 // pred_check_branch
      %37 = sbr.rel (0) target = $region33
    $region32: #{moe_forward.1} parent=1 // pred_region
      _
    $region33: #{moe_forward.1} parent=1 // pred_fallthru
      _
    // Predicated region
    $region34: #{moe_forward.1} parent=1 // pred_check
      _
    $region35: #{moe_forward.1} parent=1 // pred_check_branch
      %39 = sbr.rel (0) target = $region37
    $region36: #{moe_forward.1} parent=1 // pred_region
      _
    $region37: #{moe_forward.1} parent=1 // pred_fallthru
      _
    // Predicated region
    $region38: #{moe_forward.1} parent=1 // pred_check
      _
    $region39: #{moe_forward.1} parent=1 // pred_check_branch
      %41 = sbr.rel (0) target = $region41
    $region40: #{moe_forward.1} parent=1 // pred_region
      _
    $region41: #{moe_forward.1} parent=1 // pred_fallthru
      _
    // Predicated region
    $region42: #{moe_forward.1} parent=1 // pred_check
      _
    $region43: #{moe_forward.1} parent=1 // pred_check_branch
      %43 = sbr.rel (0) target = $region45
    $region44: #{moe_forward.1} parent=1 // pred_region
      _
    $region45: #{moe_forward.1} parent=1 // pred_fallthru
      _
    // Predicated region
    $region46: #{moe_forward.1} parent=1 // pred_check
      _
    $region47: #{moe_forward.1} parent=1 // pred_check_branch
      %45 = sbr.rel (0) target = $region49
    $region48: #{moe_forward.1} parent=1 // pred_region
      _
    $region49: #{moe_forward.1} parent=1 // pred_fallthru
      _
    %v46 = vld [vmem:[%s0] sm:$0xff]
    %v47 = vld [vmem:[%s0 + $0x8] sm:$0xff]
    %v48 = vld [vmem:[%s4] sm:$0xff]
    %v49 = vld [vmem:[%s4 + $0x8] sm:$0xff]
    %v50 = vld [vmem:[%s4 + $0x10] sm:$0xff]
    %v51 = vld [vmem:[%s4 + $0x18] sm:$0xff]
    %v52 = vld [vmem:[%s4 + $0x20] sm:$0xf]
    %vm53 = vcmask 293888
    %v55 = vsel %vm53, %v46, 0
    %vm57 = vcmask 1043456
    %v59 = vsel %vm57, %v52, 0
    %61 = vmatpush.msra.mxu0 0.0
    %62 = vmatpush.msra.mxu0 0.0
    %63 = vmatpush.msra.mxu0 0.0
    %64 = vmatpush.msra.mxu0 0.0
    %65 = vmatpush.msra.mxu0 0.0
    %66 = vmatpush.msra.mxu0 0.0
    %67 = vmatpush.msra.mxu0 0.0
    %68 = vmatpush.msra.mxu0 0.0
    %69 = vmatpush.msra.mxu0 0.0
    %70 = vmatpush.msra.mxu0 0.0
    %71 = vmatpush.msra.mxu0 0.0
    %72 = vmatpush.msra.mxu0 %v59
    %73 = vmatpush.msra.mxu0 %v51
    %74 = vmatpush.msra.mxu0 %v50
    %75 = vmatpush.msra.mxu0 %v49
    %76 = vmatpush.msra.mxu0 %v48
    %77 = vmatmul.f32.gmra.mxu0 %v55
    %v78 = vpop.f32.mrf.mxu0
    %v79 = vadd.f32 0.0, %v78
    %80 = vdwg.mxu0
    %v81 = vmax.f32 %v79, 0.0
    %v82 = vand.u32 2147483647, %v79
    %v83 = vsub.f32 0.0, %v82
    %v84 = vmul.f32 %v83, 1.442695
    %v85 = vpow.pop %v84
    %v86 = vadd.f32 %v85, 1.0
    %v87 = vlog2.pop %v86
    %v88 = vmul.f32 %v87, 0.6931472
    %v89 = vadd.f32 %v81, %v88
    %v90 = vadd.f32 %v89, 0.01
    %v91 = vld [vmem:[%s3] sm:$0xff]
    %93 = vrot.lane.b32.xlu0 %v90, 120
    %v94 = vpop.permute.xlu0 %93
    %v96 = vmul.f32 %v91, %v94
    %v97 = vadd.f32 %v79, %v96
    %v98 = vlaneseq
    %v99 = vand.u32 %v98, 127
    %vm100 = vcmask 64512
    %v101 = vsel %vm100, %v97, -inf
    %102 = vmax.xlane.f32.xlu0 %v101
    %v103 = vpop.xlane.xlu0 %102
    %vm104 = vcmp.eq.f32.partialorder %v97, %v103
    %v105 = vsel %vm104, %v99, 8
    %v106 = vsel %vm100, %v105, 2147483647
    %v107 = vand.u32 %v106, 65535
    %v108 = vshra.s32 %v106, 16
    %v109 = vcvt.s32.f32 %v107
    %v110 = vcvt.s32.f32 %v108
    %111 = vmin.xlane.f32.xlu0 %v110
    %v112 = vpop.xlane.xlu0 %111
    %vm113 = vcmp.eq.f32.partialorder %v110, %v112
    %v114 = vsel %vm113, %v109, inf
    %115 = vmin.xlane.f32.xlu0 %v114
    %v116 = vpop.xlane.xlu0 %115
    %v117 = vcvt.f32.s32 %v116
    %v118 = vcvt.f32.s32 %v112
    %v119 = vshll.u32 %v118, 16
    %v120 = vadd.s32 %v119, %v117
    %vm121 = vcmp.eq.s32.totalorder %v99, %v120
    %v122 = vsel %vm121, -inf, %v97
    %v123 = vsel %vm100, %v122, -inf
    %124 = vmax.xlane.f32.xlu0 %v123
    %v125 = vpop.xlane.xlu0 %124
    %vm126 = vcmp.eq.f32.partialorder %v122, %v125
    %v127 = vsel %vm126, %v99, 8
    %v128 = vsel %vm100, %v127, 2147483647
    %v129 = vand.u32 %v128, 65535
    %v130 = vshra.s32 %v128, 16
    %v131 = vcvt.s32.f32 %v129
    %v132 = vcvt.s32.f32 %v130
    %133 = vmin.xlane.f32.xlu0 %v132
    %v134 = vpop.xlane.xlu0 %133
    %vm135 = vcmp.eq.f32.partialorder %v132, %v134
    %v136 = vsel %vm135, %v131, inf
    %137 = vmin.xlane.f32.xlu0 %v136
    %v138 = vpop.xlane.xlu0 %137
    %v139 = vcvt.f32.s32 %v138
    %v140 = vcvt.f32.s32 %v134
    %v141 = vshll.u32 %v140, 16
    %v142 = vadd.s32 %v141, %v139
    %vm143 = vcmp.eq.s32.totalorder %v99, %v142
    %v144 = vsel %vm143, -inf, %v122
    %v145 = vsel %vm100, %v144, -inf
    %146 = vmax.xlane.f32.xlu0 %v145
    %v147 = vpop.xlane.xlu0 %146
    %v148 = vsub.f32 %v125, %v103
    %v149 = vmul.f32 %v148, 1.442695
    %v150 = vpow.pop %v149
    %v151 = vadd.f32 %v150, 1.0
    %v152 = vrcp.pop %v151
    %v153 = vsel %vm121, %v152, 0.0
    %v154 = vadd.f32 %v153, 0.0
    %v155 = vmul.f32 %v150, %v152
    %v156 = vsel %vm143, %v155, 0.0
    %v157 = vadd.f32 %v154, %v156
    %v158 = vsel %vm100, %v157, 0.0
    %v159 = vrot.slane %v158, 4
    %v160 = vadd.f32 %v158, %v159
    %v161 = vrot.slane %v160, 2
    %v162 = vadd.f32 %v160, %v161
    %v163 = vrot.slane %v162, 1
    %v164 = vadd.f32 %v162, %v163
    %vm165 = vcmp.gt.f32.partialorder %v157, 0.0
    %v166 = vsel %vm165, 1, 0
    %v167 = vcvt.s32.f32 %v166
    %v168 = vsel %vm100, %v167, 0.0
    %169 = vadd.xlane.f32.xlu0 %v168
    %v170 = vpop.xlane.xlu0 %169
    %v171 = vlog2.pop %v170
    %v172 = vmul.f32 %v171, 0.6931472
    %v173 = vld [vmem:[%s11] sm:$0x3f]
    %v174 = vld [vmem:[%s11 + $0x8] sm:$0x3f]
    %v175 = vld [vmem:[%s11 + $0x10] sm:$0x3f]
    %v176 = vld [vmem:[%s5] sm:$0xff]
    %v177 = vld [vmem:[%s5 + $0x8] sm:$0xff]
    %v178 = vld [vmem:[%s5 + $0x10] sm:$0xff]
    %v179 = vld [vmem:[%s5 + $0x18] sm:$0xff]
    %v180 = vld [vmem:[%s5 + $0x20] sm:$0xf]
    %v181 = vperm.slane %v173, 0
    %v183 = vsel %vm53, %v47, 0
    %v186 = vsel %vm57, %v180, 0
    %188 = vmatpush.msra.mxu0 0.0
    %189 = vmatpush.msra.mxu0 0.0
    %190 = vmatpush.msra.mxu0 0.0
    %191 = vmatpush.msra.mxu0 0.0
    %192 = vmatpush.msra.mxu0 0.0
    %193 = vmatpush.msra.mxu0 0.0
    %194 = vmatpush.msra.mxu0 0.0
    %195 = vmatpush.msra.mxu0 0.0
    %196 = vmatpush.msra.mxu0 0.0
    %197 = vmatpush.msra.mxu0 0.0
    %198 = vmatpush.msra.mxu0 0.0
    %199 = vmatpush.msra.mxu0 %v186
    %200 = vmatpush.msra.mxu0 %v179
    %201 = vmatpush.msra.mxu0 %v178
    %202 = vmatpush.msra.mxu0 %v177
    %203 = vmatpush.msra.mxu0 %v176
    %204 = vmatmul.f32.gmra.mxu0 %v55
    %v205 = vpop.f32.mrf.mxu0
    %v206 = vadd.f32 %v181, %v205
    %207 = vmatmul.f32.gmra.mxu0 %v183
    %v208 = vpop.f32.mrf.mxu0
    %v209 = vadd.f32 %v181, %v208
    %210 = vdwg.mxu0
    %v211 = vmax.f32 %v206, 0.0
    %v212 = vmax.f32 %v209, 0.0
    %v213 = vld [vmem:[%s6] sm:$0xff]
    %v214 = vld [vmem:[%s6 + $0x8] sm:$0xff]
    %v215 = vld [vmem:[%s6 + $0x10] sm:$0xff]
    %v216 = vld [vmem:[%s6 + $0x18] sm:$0xff]
    %v217 = vld [vmem:[%s6 + $0x20] sm:$0xff]
    %v218 = vld [vmem:[%s6 + $0x28] sm:$0xff]
    %v219 = vld [vmem:[%s6 + $0x30] sm:$0xff]
    %v220 = vld [vmem:[%s6 + $0x38] sm:$0xff]
    %v221 = vld [vmem:[%s6 + $0x40] sm:$0xff]
    %v222 = vld [vmem:[%s6 + $0x48] sm:$0xff]
    %v223 = vld [vmem:[%s6 + $0x50] sm:$0xff]
    %v224 = vld [vmem:[%s6 + $0x58] sm:$0xff]
    %v225 = vld [vmem:[%s6 + $0x60] sm:$0xff]
    %v226 = vld [vmem:[%s6 + $0x68] sm:$0xff]
    %v227 = vld [vmem:[%s6 + $0x70] sm:$0xff]
    %v228 = vld [vmem:[%s6 + $0x78] sm:$0xff]
    %v229 = vld [vmem:[%s6 + $0x80] sm:$0xff]
    %v230 = vld [vmem:[%s6 + $0x88] sm:$0xff]
    %v231 = vperm.slane %v173, 1
    %v232 = vperm.slane %v174, 1
    %vm233 = vcmask 588800
    %v235 = vsel %vm233, %v211, 0
    %v238 = vsel %vm233, %v212, 0
    %240 = vmatpush.msra.mxu0 0.0
    %241 = vmatpush.msra.mxu0 0.0
    %242 = vmatpush.msra.mxu0 0.0
    %243 = vmatpush.msra.mxu0 0.0
    %244 = vmatpush.msra.mxu0 0.0
    %245 = vmatpush.msra.mxu0 0.0
    %246 = vmatpush.msra.mxu0 0.0
    %247 = vmatpush.msra.mxu0 %v229
    %248 = vmatpush.msra.mxu0 %v227
    %249 = vmatpush.msra.mxu0 %v225
    %250 = vmatpush.msra.mxu0 %v223
    %251 = vmatpush.msra.mxu0 %v221
    %252 = vmatpush.msra.mxu0 %v219
    %253 = vmatpush.msra.mxu0 %v217
    %254 = vmatpush.msra.mxu0 %v215
    %255 = vmatpush.msra.mxu0 %v213
    %256 = vmatmul.f32.gmra.mxu0 %v235
    %v257 = vpop.f32.mrf.mxu0
    %v258 = vadd.f32 %v231, %v257
    %259 = vmatmul.f32.gmra.mxu0 %v238
    %v260 = vpop.f32.mrf.mxu0
    %v261 = vadd.f32 %v231, %v260
    %262 = vdwg.mxu0
    %263 = vmatpush.msra.mxu0 0.0
    %264 = vmatpush.msra.mxu0 0.0
    %265 = vmatpush.msra.mxu0 0.0
    %266 = vmatpush.msra.mxu0 0.0
    %267 = vmatpush.msra.mxu0 0.0
    %268 = vmatpush.msra.mxu0 0.0
    %269 = vmatpush.msra.mxu0 0.0
    %270 = vmatpush.msra.mxu0 %v230
    %271 = vmatpush.msra.mxu0 %v228
    %272 = vmatpush.msra.mxu0 %v226
    %273 = vmatpush.msra.mxu0 %v224
    %274 = vmatpush.msra.mxu0 %v222
    %275 = vmatpush.msra.mxu0 %v220
    %276 = vmatpush.msra.mxu0 %v218
    %277 = vmatpush.msra.mxu0 %v216
    %278 = vmatpush.msra.mxu0 %v214
    %279 = vmatmul.f32.gmra.mxu0 %v235
    %v280 = vpop.f32.mrf.mxu0
    %v281 = vadd.f32 %v232, %v280
    %282 = vmatmul.f32.gmra.mxu0 %v238
    %v283 = vpop.f32.mrf.mxu0
    %v284 = vadd.f32 %v232, %v283
    %285 = vdwg.mxu0
    %v286 = vmax.f32 %v258, 0.0
    %v287 = vmax.f32 %v281, 0.0
    %v288 = vmax.f32 %v261, 0.0
    %v289 = vmax.f32 %v284, 0.0
    %v290 = vld [vmem:[%s7] sm:$0xff]
    %v291 = vld [vmem:[%s7 + $0x8] sm:$0xff]
    %v292 = vld [vmem:[%s7 + $0x10] sm:$0xff]
    %v293 = vld [vmem:[%s7 + $0x18] sm:$0xff]
    %v294 = vld [vmem:[%s7 + $0x20] sm:$0xff]
    %v295 = vld [vmem:[%s7 + $0x28] sm:$0xff]
    %v296 = vld [vmem:[%s7 + $0x30] sm:$0xff]
    %v297 = vld [vmem:[%s7 + $0x38] sm:$0xff]
    %v298 = vld [vmem:[%s7 + $0x40] sm:$0xff]
    %v299 = vld [vmem:[%s7 + $0x48] sm:$0xff]
    %v300 = vld [vmem:[%s7 + $0x50] sm:$0xff]
    %v301 = vld [vmem:[%s7 + $0x58] sm:$0xff]
    %v302 = vld [vmem:[%s7 + $0x60] sm:$0xff]
    %v303 = vld [vmem:[%s7 + $0x68] sm:$0xff]
    %v304 = vld [vmem:[%s7 + $0x70] sm:$0xff]
    %v305 = vld [vmem:[%s7 + $0x78] sm:$0xff]
    %v306 = vld [vmem:[%s7 + $0x80] sm:$0xff]
    %v307 = vld [vmem:[%s7 + $0x88] sm:$0xff]
    %v308 = vperm.slane %v173, 2
    %vm309 = vcmask 130048
    %v311 = vsel %vm309, %v287, 0
    %v314 = vsel %vm309, %v289, 0
    %316 = vmatpush.msra.mxu0 %v305
    %317 = vmatpush.msra.mxu0 %v304
    %318 = vmatpush.msra.mxu0 %v303
    %319 = vmatpush.msra.mxu0 %v302
    %320 = vmatpush.msra.mxu0 %v301
    %321 = vmatpush.msra.mxu0 %v300
    %322 = vmatpush.msra.mxu0 %v299
    %323 = vmatpush.msra.mxu0 %v298
    %324 = vmatpush.msra.mxu0 %v297
    %325 = vmatpush.msra.mxu0 %v296
    %326 = vmatpush.msra.mxu0 %v295
    %327 = vmatpush.msra.mxu0 %v294
    %328 = vmatpush.msra.mxu0 %v293
    %329 = vmatpush.msra.mxu0 %v292
    %330 = vmatpush.msra.mxu0 %v291
    %331 = vmatpush.msra.mxu0 %v290
    %332 = vmatmul.f32.gmra.mxu0 %v286
    %v333 = vpop.f32.mrf.mxu0
    %v334 = vadd.f32 %v308, %v333
    %335 = vmatmul.f32.gmra.mxu0 %v288
    %v336 = vpop.f32.mrf.mxu0
    %v337 = vadd.f32 %v308, %v336
    %338 = vdwg.mxu0
    %339 = vmatpush.msra.mxu0 0.0
    %340 = vmatpush.msra.mxu0 0.0
    %341 = vmatpush.msra.mxu0 0.0
    %342 = vmatpush.msra.mxu0 0.0
    %343 = vmatpush.msra.mxu0 0.0
    %344 = vmatpush.msra.mxu0 0.0
    %345 = vmatpush.msra.mxu0 0.0
    %346 = vmatpush.msra.mxu0 0.0
    %347 = vmatpush.msra.mxu0 0.0
    %348 = vmatpush.msra.mxu0 0.0
    %349 = vmatpush.msra.mxu0 0.0
    %350 = vmatpush.msra.mxu0 0.0
    %351 = vmatpush.msra.mxu0 0.0
    %352 = vmatpush.msra.mxu0 0.0
    %353 = vmatpush.msra.mxu0 %v307
    %354 = vmatpush.msra.mxu0 %v306
    %355 = vmatmul.f32.gmra.mxu0 %v311
    %v356 = vpop.f32.mrf.mxu0
    %v357 = vadd.f32 %v334, %v356
    %358 = vmatmul.f32.gmra.mxu0 %v314
    %v359 = vpop.f32.mrf.mxu0
    %v360 = vadd.f32 %v337, %v359
    %361 = vdwg.mxu0
    %v362 = vmax.f32 %v357, 0.0
    %v363 = vmax.f32 %v360, 0.0
    %v364 = vld [vmem:[%s1] sm:$0xff]
    %v365 = vld [vmem:[%s1 + $0x8] sm:$0xff]
    %v366 = vld [vmem:[%s2] sm:$0xff]
    %v367 = vld [vmem:[%s2 + $0x8] sm:$0xff]
    %v368 = vadd.f32 %v364, %v366
    %v369 = vadd.f32 %v365, %v367
    %v370 = vld [vmem:[%s8] sm:$0xff]
    %v371 = vld [vmem:[%s8 + $0x8] sm:$0xff]
    %v372 = vld [vmem:[%s8 + $0x10] sm:$0xff]
    %v373 = vld [vmem:[%s8 + $0x18] sm:$0xff]
    %v374 = vld [vmem:[%s8 + $0x20] sm:$0xff]
    %v375 = vld [vmem:[%s8 + $0x28] sm:$0xff]
    %v376 = vld [vmem:[%s8 + $0x30] sm:$0xff]
    %v377 = vld [vmem:[%s8 + $0x38] sm:$0xff]
    %v378 = vld [vmem:[%s8 + $0x40] sm:$0xff]
    %v379 = vld [vmem:[%s8 + $0x48] sm:$0xff]
    %v380 = vld [vmem:[%s8 + $0x50] sm:$0xff]
    %v381 = vld [vmem:[%s8 + $0x58] sm:$0xff]
    %v382 = vld [vmem:[%s8 + $0x60] sm:$0xff]
    %v383 = vld [vmem:[%s8 + $0x68] sm:$0xff]
    %v384 = vld [vmem:[%s8 + $0x70] sm:$0xff]
    %v385 = vld [vmem:[%s8 + $0x78] sm:$0xff]
    %v386 = vld [vmem:[%s8 + $0x80] sm:$0xff]
    %v387 = vld [vmem:[%s8 + $0x88] sm:$0xff]
    %v388 = vld [vmem:[%s8 + $0x90] sm:$0xff]
    %v389 = vld [vmem:[%s8 + $0x98] sm:$0xff]
    %v390 = vld [vmem:[%s8 + $0xa0] sm:$0xff]
    %v391 = vld [vmem:[%s8 + $0xa8] sm:$0xff]
    %v392 = vld [vmem:[%s8 + $0xb0] sm:$0xff]
    %v393 = vld [vmem:[%s8 + $0xb8] sm:$0xff]
    %v394 = vld [vmem:[%s8 + $0xc0] sm:$0xff]
    %v395 = vld [vmem:[%s8 + $0xc8] sm:$0xff]
    %v396 = vld [vmem:[%s8 + $0xd0] sm:$0xff]
    %v397 = vld [vmem:[%s8 + $0xd8] sm:$0xff]
    %v398 = vld [vmem:[%s8 + $0xe0] sm:$0xff]
    %v399 = vld [vmem:[%s8 + $0xe8] sm:$0xff]
    %v400 = vld [vmem:[%s8 + $0xf0] sm:$0xff]
    %v401 = vld [vmem:[%s8 + $0xf8] sm:$0xff]
    %v402 = vld [vmem:[%s8 + $0x100] sm:$0xf]
    %v403 = vld [vmem:[%s8 + $0x108] sm:$0xf]
    %v404 = vperm.slane %v173, 3
    %v405 = vperm.slane %v174, 3
    %vm406 = vcmask 31744
    %v408 = vsel %vm406, %v369, 0
    %v411 = vsel %vm57, %v402, 0
    %v414 = vsel %vm57, %v403, 0
    %416 = vmatpush.msra.mxu0 %v400
    %417 = vmatpush.msra.mxu0 %v398
    %418 = vmatpush.msra.mxu0 %v396
    %419 = vmatpush.msra.mxu0 %v394
    %420 = vmatpush.msra.mxu0 %v392
    %421 = vmatpush.msra.mxu0 %v390
    %422 = vmatpush.msra.mxu0 %v388
    %423 = vmatpush.msra.mxu0 %v386
    %424 = vmatpush.msra.mxu0 %v384
    %425 = vmatpush.msra.mxu0 %v382
    %426 = vmatpush.msra.mxu0 %v380
    %427 = vmatpush.msra.mxu0 %v378
    %428 = vmatpush.msra.mxu0 %v376
    %429 = vmatpush.msra.mxu0 %v374
    %430 = vmatpush.msra.mxu0 %v372
    %431 = vmatpush.msra.mxu0 %v370
    %432 = vmatmul.f32.gmra.mxu0 %v368
    %v433 = vpop.f32.mrf.mxu0
    %v434 = vadd.f32 %v404, %v433
    %435 = vdwg.mxu0
    %436 = vmatpush.msra.mxu0 0.0
    %437 = vmatpush.msra.mxu0 0.0
    %438 = vmatpush.msra.mxu0 0.0
    %439 = vmatpush.msra.mxu0 0.0
    %440 = vmatpush.msra.mxu0 0.0
    %441 = vmatpush.msra.mxu0 0.0
    %442 = vmatpush.msra.mxu0 0.0
    %443 = vmatpush.msra.mxu0 0.0
    %444 = vmatpush.msra.mxu0 0.0
    %445 = vmatpush.msra.mxu0 0.0
    %446 = vmatpush.msra.mxu0 0.0
    %447 = vmatpush.msra.mxu0 0.0
    %448 = vmatpush.msra.mxu0 0.0
    %449 = vmatpush.msra.mxu0 0.0
    %450 = vmatpush.msra.mxu0 0.0
    %451 = vmatpush.msra.mxu0 %v411
    %452 = vmatmul.f32.gmra.mxu0 %v408
    %v453 = vpop.f32.mrf.mxu0
    %v454 = vadd.f32 %v434, %v453
    %455 = vdwg.mxu0
    %456 = vmatpush.msra.mxu0 %v401
    %457 = vmatpush.msra.mxu0 %v399
    %458 = vmatpush.msra.mxu0 %v397
    %459 = vmatpush.msra.mxu0 %v395
    %460 = vmatpush.msra.mxu0 %v393
    %461 = vmatpush.msra.mxu0 %v391
    %462 = vmatpush.msra.mxu0 %v389
    %463 = vmatpush.msra.mxu0 %v387
    %464 = vmatpush.msra.mxu0 %v385
    %465 = vmatpush.msra.mxu0 %v383
    %466 = vmatpush.msra.mxu0 %v381
    %467 = vmatpush.msra.mxu0 %v379
    %468 = vmatpush.msra.mxu0 %v377
    %469 = vmatpush.msra.mxu0 %v375
    %470 = vmatpush.msra.mxu0 %v373
    %471 = vmatpush.msra.mxu0 %v371
    %472 = vmatmul.f32.gmra.mxu0 %v368
    %v473 = vpop.f32.mrf.mxu0
    %v474 = vadd.f32 %v405, %v473
    %475 = vdwg.mxu0
    %476 = vmatpush.msra.mxu0 0.0
    %477 = vmatpush.msra.mxu0 0.0
    %478 = vmatpush.msra.mxu0 0.0
    %479 = vmatpush.msra.mxu0 0.0
    %480 = vmatpush.msra.mxu0 0.0
    %481 = vmatpush.msra.mxu0 0.0
    %482 = vmatpush.msra.mxu0 0.0
    %483 = vmatpush.msra.mxu0 0.0
    %484 = vmatpush.msra.mxu0 0.0
    %485 = vmatpush.msra.mxu0 0.0
    %486 = vmatpush.msra.mxu0 0.0
    %487 = vmatpush.msra.mxu0 0.0
    %488 = vmatpush.msra.mxu0 0.0
    %489 = vmatpush.msra.mxu0 0.0
    %490 = vmatpush.msra.mxu0 0.0
    %491 = vmatpush.msra.mxu0 %v414
    %492 = vmatmul.f32.gmra.mxu0 %v408
    %v493 = vpop.f32.mrf.mxu0
    %v494 = vadd.f32 %v474, %v493
    %495 = vdwg.mxu0
    %v496 = vmax.f32 %v454, 0.0
    %v497 = vmax.f32 %v494, 0.0
    %v498 = vld [vmem:[%s9] sm:$0xff]
    %v499 = vld [vmem:[%s9 + $0x8] sm:$0xff]
    %v500 = vld [vmem:[%s9 + $0x10] sm:$0xff]
    %v501 = vld [vmem:[%s9 + $0x18] sm:$0xff]
    %v502 = vld [vmem:[%s9 + $0x20] sm:$0xff]
    %v503 = vld [vmem:[%s9 + $0x28] sm:$0xff]
    %v504 = vld [vmem:[%s9 + $0x30] sm:$0xff]
    %v505 = vld [vmem:[%s9 + $0x38] sm:$0xff]
    %v506 = vld [vmem:[%s9 + $0x40] sm:$0xff]
    %v507 = vld [vmem:[%s9 + $0x48] sm:$0xff]
    %v508 = vld [vmem:[%s9 + $0x50] sm:$0xff]
    %v509 = vld [vmem:[%s9 + $0x58] sm:$0xff]
    %v510 = vld [vmem:[%s9 + $0x60] sm:$0xff]
    %v511 = vld [vmem:[%s9 + $0x68] sm:$0xff]
    %v512 = vld [vmem:[%s9 + $0x70] sm:$0xff]
    %v513 = vld [vmem:[%s9 + $0x78] sm:$0xff]
    %v514 = vld [vmem:[%s9 + $0x80] sm:$0xff]
    %v515 = vld [vmem:[%s9 + $0x88] sm:$0xff]
    %v516 = vld [vmem:[%s9 + $0x90] sm:$0xff]
    %v517 = vld [vmem:[%s9 + $0x98] sm:$0xff]
    %v518 = vld [vmem:[%s9 + $0xa0] sm:$0xff]
    %v519 = vld [vmem:[%s9 + $0xa8] sm:$0xff]
    %v520 = vld [vmem:[%s9 + $0xb0] sm:$0xff]
    %v521 = vld [vmem:[%s9 + $0xb8] sm:$0xff]
    %v522 = vld [vmem:[%s9 + $0xc0] sm:$0xff]
    %v523 = vld [vmem:[%s9 + $0xc8] sm:$0xff]
    %v524 = vld [vmem:[%s9 + $0xd0] sm:$0xff]
    %v525 = vld [vmem:[%s9 + $0xd8] sm:$0xff]
    %v526 = vld [vmem:[%s9 + $0xe0] sm:$0xff]
    %v527 = vld [vmem:[%s9 + $0xe8] sm:$0xff]
    %v528 = vld [vmem:[%s9 + $0xf0] sm:$0xff]
    %v529 = vld [vmem:[%s9 + $0xf8] sm:$0xff]
    %v530 = vld [vmem:[%s9 + $0x100] sm:$0xff]
    %v531 = vld [vmem:[%s9 + $0x108] sm:$0xff]
    %v532 = vld [vmem:[%s9 + $0x110] sm:$0xff]
    %v533 = vld [vmem:[%s9 + $0x118] sm:$0xff]
    %v534 = vld [vmem:[%s9 + $0x120] sm:$0xff]
    %v535 = vld [vmem:[%s9 + $0x128] sm:$0xff]
    %v536 = vld [vmem:[%s9 + $0x130] sm:$0xff]
    %v537 = vld [vmem:[%s9 + $0x138] sm:$0xff]
    %v538 = vld [vmem:[%s9 + $0x140] sm:$0xff]
    %v539 = vld [vmem:[%s9 + $0x148] sm:$0xff]
    %v540 = vld [vmem:[%s9 + $0x150] sm:$0xff]
    %v541 = vld [vmem:[%s9 + $0x158] sm:$0xff]
    %v542 = vld [vmem:[%s9 + $0x160] sm:$0xff]
    %v543 = vld [vmem:[%s9 + $0x168] sm:$0xff]
    %v544 = vld [vmem:[%s9 + $0x170] sm:$0xff]
    %v545 = vld [vmem:[%s9 + $0x178] sm:$0xff]
    %v546 = vld [vmem:[%s9 + $0x180] sm:$0xf]
    %v547 = vld [vmem:[%s9 + $0x188] sm:$0xf]
    %v548 = vld [vmem:[%s9 + $0x190] sm:$0xf]
    %v549 = vperm.slane %v173, 4
    %v550 = vperm.slane %v174, 4
    %v551 = vperm.slane %v175, 4
    %v553 = vsel %vm406, %v497, 0
    %v556 = vsel %vm57, %v546, 0
    %v559 = vsel %vm57, %v547, 0
    %v562 = vsel %vm57, %v548, 0
    %564 = vmatpush.msra.mxu0 %v543
    %565 = vmatpush.msra.mxu0 %v540
    %566 = vmatpush.msra.mxu0 %v537
    %567 = vmatpush.msra.mxu0 %v534
    %568 = vmatpush.msra.mxu0 %v531
    %569 = vmatpush.msra.mxu0 %v528
    %570 = vmatpush.msra.mxu0 %v525
    %571 = vmatpush.msra.mxu0 %v522
    %572 = vmatpush.msra.mxu0 %v519
    %573 = vmatpush.msra.mxu0 %v516
    %574 = vmatpush.msra.mxu0 %v513
    %575 = vmatpush.msra.mxu0 %v510
    %576 = vmatpush.msra.mxu0 %v507
    %577 = vmatpush.msra.mxu0 %v504
    %578 = vmatpush.msra.mxu0 %v501
    %579 = vmatpush.msra.mxu0 %v498
    %580 = vmatmul.f32.gmra.mxu0 %v496
    %v581 = vpop.f32.mrf.mxu0
    %v582 = vadd.f32 %v549, %v581
    %583 = vdwg.mxu0
    %584 = vmatpush.msra.mxu0 0.0
    %585 = vmatpush.msra.mxu0 0.0
    %586 = vmatpush.msra.mxu0 0.0
    %587 = vmatpush.msra.mxu0 0.0
    %588 = vmatpush.msra.mxu0 0.0
    %589 = vmatpush.msra.mxu0 0.0
    %590 = vmatpush.msra.mxu0 0.0
    %591 = vmatpush.msra.mxu0 0.0
    %592 = vmatpush.msra.mxu0 0.0
    %593 = vmatpush.msra.mxu0 0.0
    %594 = vmatpush.msra.mxu0 0.0
    %595 = vmatpush.msra.mxu0 0.0
    %596 = vmatpush.msra.mxu0 0.0
    %597 = vmatpush.msra.mxu0 0.0
    %598 = vmatpush.msra.mxu0 0.0
    %599 = vmatpush.msra.mxu0 %v556
    %600 = vmatmul.f32.gmra.mxu0 %v553
    %v601 = vpop.f32.mrf.mxu0
    %v602 = vadd.f32 %v582, %v601
    %603 = vdwg.mxu0
    %604 = vmatpush.msra.mxu0 %v544
    %605 = vmatpush.msra.mxu0 %v541
    %606 = vmatpush.msra.mxu0 %v538
    %607 = vmatpush.msra.mxu0 %v535
    %608 = vmatpush.msra.mxu0 %v532
    %609 = vmatpush.msra.mxu0 %v529
    %610 = vmatpush.msra.mxu0 %v526
    %611 = vmatpush.msra.mxu0 %v523
    %612 = vmatpush.msra.mxu0 %v520
    %613 = vmatpush.msra.mxu0 %v517
    %614 = vmatpush.msra.mxu0 %v514
    %615 = vmatpush.msra.mxu0 %v511
    %616 = vmatpush.msra.mxu0 %v508
    %617 = vmatpush.msra.mxu0 %v505
    %618 = vmatpush.msra.mxu0 %v502
    %619 = vmatpush.msra.mxu0 %v499
    %620 = vmatmul.f32.gmra.mxu0 %v496
    %v621 = vpop.f32.mrf.mxu0
    %v622 = vadd.f32 %v550, %v621
    %623 = vdwg.mxu0
    %624 = vmatpush.msra.mxu0 0.0
    %625 = vmatpush.msra.mxu0 0.0
    %626 = vmatpush.msra.mxu0 0.0
    %627 = vmatpush.msra.mxu0 0.0
    %628 = vmatpush.msra.mxu0 0.0
    %629 = vmatpush.msra.mxu0 0.0
    %630 = vmatpush.msra.mxu0 0.0
    %631 = vmatpush.msra.mxu0 0.0
    %632 = vmatpush.msra.mxu0 0.0
    %633 = vmatpush.msra.mxu0 0.0
    %634 = vmatpush.msra.mxu0 0.0
    %635 = vmatpush.msra.mxu0 0.0
    %636 = vmatpush.msra.mxu0 0.0
    %637 = vmatpush.msra.mxu0 0.0
    %638 = vmatpush.msra.mxu0 0.0
    %639 = vmatpush.msra.mxu0 %v559
    %640 = vmatmul.f32.gmra.mxu0 %v553
    %v641 = vpop.f32.mrf.mxu0
    %v642 = vadd.f32 %v622, %v641
    %643 = vdwg.mxu0
    %644 = vmatpush.msra.mxu0 %v545
    %645 = vmatpush.msra.mxu0 %v542
    %646 = vmatpush.msra.mxu0 %v539
    %647 = vmatpush.msra.mxu0 %v536
    %648 = vmatpush.msra.mxu0 %v533
    %649 = vmatpush.msra.mxu0 %v530
    %650 = vmatpush.msra.mxu0 %v527
    %651 = vmatpush.msra.mxu0 %v524
    %652 = vmatpush.msra.mxu0 %v521
    %653 = vmatpush.msra.mxu0 %v518
    %654 = vmatpush.msra.mxu0 %v515
    %655 = vmatpush.msra.mxu0 %v512
    %656 = vmatpush.msra.mxu0 %v509
    %657 = vmatpush.msra.mxu0 %v506
    %658 = vmatpush.msra.mxu0 %v503
    %659 = vmatpush.msra.mxu0 %v500
    %660 = vmatmul.f32.gmra.mxu0 %v496
    %v661 = vpop.f32.mrf.mxu0
    %v662 = vadd.f32 %v551, %v661
    %663 = vdwg.mxu0
    %664 = vmatpush.msra.mxu0 0.0
    %665 = vmatpush.msra.mxu0 0.0
    %666 = vmatpush.msra.mxu0 0.0
    %667 = vmatpush.msra.mxu0 0.0
    %668 = vmatpush.msra.mxu0 0.0
    %669 = vmatpush.msra.mxu0 0.0
    %670 = vmatpush.msra.mxu0 0.0
    %671 = vmatpush.msra.mxu0 0.0
    %672 = vmatpush.msra.mxu0 0.0
    %673 = vmatpush.msra.mxu0 0.0
    %674 = vmatpush.msra.mxu0 0.0
    %675 = vmatpush.msra.mxu0 0.0
    %676 = vmatpush.msra.mxu0 0.0
    %677 = vmatpush.msra.mxu0 0.0
    %678 = vmatpush.msra.mxu0 0.0
    %679 = vmatpush.msra.mxu0 %v562
    %680 = vmatmul.f32.gmra.mxu0 %v553
    %v681 = vpop.f32.mrf.mxu0
    %v682 = vadd.f32 %v662, %v681
    %683 = vdwg.mxu0
    %v684 = vmax.f32 %v602, 0.0
    %v685 = vmax.f32 %v642, 0.0
    %v686 = vmax.f32 %v682, 0.0
    %v687 = vld [vmem:[%s10] sm:$0xff]
    %v688 = vld [vmem:[%s10 + $0x8] sm:$0xff]
    %v689 = vld [vmem:[%s10 + $0x10] sm:$0xff]
    %v690 = vld [vmem:[%s10 + $0x18] sm:$0xff]
    %v691 = vld [vmem:[%s10 + $0x20] sm:$0xff]
    %v692 = vld [vmem:[%s10 + $0x28] sm:$0xff]
    %v693 = vld [vmem:[%s10 + $0x30] sm:$0xff]
    %v694 = vld [vmem:[%s10 + $0x38] sm:$0xff]
    %v695 = vld [vmem:[%s10 + $0x40] sm:$0xff]
    %v696 = vld [vmem:[%s10 + $0x48] sm:$0xff]
    %v697 = vld [vmem:[%s10 + $0x50] sm:$0xff]
    %v698 = vld [vmem:[%s10 + $0x58] sm:$0xff]
    %v699 = vld [vmem:[%s10 + $0x60] sm:$0xff]
    %v700 = vld [vmem:[%s10 + $0x68] sm:$0xff]
    %v701 = vld [vmem:[%s10 + $0x70] sm:$0xff]
    %v702 = vld [vmem:[%s10 + $0x78] sm:$0xff]
    %v703 = vld [vmem:[%s10 + $0x80] sm:$0xff]
    %v704 = vld [vmem:[%s10 + $0x88] sm:$0xff]
    %v705 = vld [vmem:[%s10 + $0x90] sm:$0xff]
    %v706 = vld [vmem:[%s10 + $0x98] sm:$0xff]
    %v707 = vld [vmem:[%s10 + $0xa0] sm:$0xff]
    %v708 = vld [vmem:[%s10 + $0xa8] sm:$0xff]
    %v709 = vld [vmem:[%s10 + $0xb0] sm:$0xff]
    %v710 = vld [vmem:[%s10 + $0xb8] sm:$0xff]
    %v711 = vld [vmem:[%s10 + $0xc0] sm:$0xff]
    %v712 = vld [vmem:[%s10 + $0xc8] sm:$0xff]
    %v713 = vld [vmem:[%s10 + $0xd0] sm:$0xff]
    %v714 = vld [vmem:[%s10 + $0xd8] sm:$0xff]
    %v715 = vld [vmem:[%s10 + $0xe0] sm:$0xff]
    %v716 = vld [vmem:[%s10 + $0xe8] sm:$0xff]
    %v717 = vld [vmem:[%s10 + $0xf0] sm:$0xff]
    %v718 = vld [vmem:[%s10 + $0xf8] sm:$0xff]
    %v719 = vld [vmem:[%s10 + $0x100] sm:$0xff]
    %v720 = vld [vmem:[%s10 + $0x108] sm:$0xff]
    %v721 = vld [vmem:[%s10 + $0x110] sm:$0xff]
    %v722 = vld [vmem:[%s10 + $0x118] sm:$0xff]
    %v723 = vld [vmem:[%s10 + $0x120] sm:$0xff]
    %v724 = vld [vmem:[%s10 + $0x128] sm:$0xff]
    %v725 = vld [vmem:[%s10 + $0x130] sm:$0xff]
    %v726 = vld [vmem:[%s10 + $0x138] sm:$0xff]
    %v727 = vld [vmem:[%s10 + $0x140] sm:$0xff]
    %v728 = vld [vmem:[%s10 + $0x148] sm:$0xff]
    %v729 = vld [vmem:[%s10 + $0x150] sm:$0xff]
    %v730 = vld [vmem:[%s10 + $0x158] sm:$0xff]
    %v731 = vld [vmem:[%s10 + $0x160] sm:$0xff]
    %v732 = vld [vmem:[%s10 + $0x168] sm:$0xff]
    %v733 = vld [vmem:[%s10 + $0x170] sm:$0xff]
    %v734 = vld [vmem:[%s10 + $0x178] sm:$0xff]
    %v735 = vld [vmem:[%s10 + $0x180] sm:$0xff]
    %v736 = vld [vmem:[%s10 + $0x188] sm:$0xff]
    %v737 = vld [vmem:[%s10 + $0x190] sm:$0xff]
    %v738 = vld [vmem:[%s10 + $0x198] sm:$0xff]
    %v739 = vld [vmem:[%s10 + $0x1a0] sm:$0xff]
    %v740 = vld [vmem:[%s10 + $0x1a8] sm:$0xff]
    %v741 = vld [vmem:[%s10 + $0x1b0] sm:$0xff]
    %v742 = vld [vmem:[%s10 + $0x1b8] sm:$0xff]
    %v743 = vld [vmem:[%s10 + $0x1c0] sm:$0xff]
    %v744 = vld [vmem:[%s10 + $0x1c8] sm:$0xff]
    %v745 = vld [vmem:[%s10 + $0x1d0] sm:$0xff]
    %v746 = vld [vmem:[%s10 + $0x1d8] sm:$0xff]
    %v747 = vld [vmem:[%s10 + $0x1e0] sm:$0xff]
    %v748 = vld [vmem:[%s10 + $0x1e8] sm:$0xff]
    %v749 = vld [vmem:[%s10 + $0x1f0] sm:$0xff]
    %v750 = vld [vmem:[%s10 + $0x1f8] sm:$0xff]
    %v751 = vld [vmem:[%s10 + $0x200] sm:$0xff]
    %v752 = vld [vmem:[%s10 + $0x208] sm:$0xff]
    %v753 = vperm.slane %v173, 5
    %v754 = vperm.slane %v174, 5
    %v756 = vsel %vm100, %v686, 0
    %758 = vmatpush.msra.mxu0 %v717
    %759 = vmatpush.msra.mxu0 %v715
    %760 = vmatpush.msra.mxu0 %v713
    %761 = vmatpush.msra.mxu0 %v711
    %762 = vmatpush.msra.mxu0 %v709
    %763 = vmatpush.msra.mxu0 %v707
    %764 = vmatpush.msra.mxu0 %v705
    %765 = vmatpush.msra.mxu0 %v703
    %766 = vmatpush.msra.mxu0 %v701
    %767 = vmatpush.msra.mxu0 %v699
    %768 = vmatpush.msra.mxu0 %v697
    %769 = vmatpush.msra.mxu0 %v695
    %770 = vmatpush.msra.mxu0 %v693
    %771 = vmatpush.msra.mxu0 %v691
    %772 = vmatpush.msra.mxu0 %v689
    %773 = vmatpush.msra.mxu0 %v687
    %774 = vmatmul.f32.gmra.mxu0 %v684
    %v775 = vpop.f32.mrf.mxu0
    %v776 = vadd.f32 %v753, %v775
    %777 = vdwg.mxu0
    %778 = vmatpush.msra.mxu0 %v749
    %779 = vmatpush.msra.mxu0 %v747
    %780 = vmatpush.msra.mxu0 %v745
    %781 = vmatpush.msra.mxu0 %v743
    %782 = vmatpush.msra.mxu0 %v741
    %783 = vmatpush.msra.mxu0 %v739
    %784 = vmatpush.msra.mxu0 %v737
    %785 = vmatpush.msra.mxu0 %v735
    %786 = vmatpush.msra.mxu0 %v733
    %787 = vmatpush.msra.mxu0 %v731
    %788 = vmatpush.msra.mxu0 %v729
    %789 = vmatpush.msra.mxu0 %v727
    %790 = vmatpush.msra.mxu0 %v725
    %791 = vmatpush.msra.mxu0 %v723
    %792 = vmatpush.msra.mxu0 %v721
    %793 = vmatpush.msra.mxu0 %v719
    %794 = vmatmul.f32.gmra.mxu0 %v685
    %v795 = vpop.f32.mrf.mxu0
    %v796 = vadd.f32 %v776, %v795
    %797 = vdwg.mxu0
    %798 = vmatpush.msra.mxu0 0.0
    %799 = vmatpush.msra.mxu0 0.0
    %800 = vmatpush.msra.mxu0 0.0
    %801 = vmatpush.msra.mxu0 0.0
    %802 = vmatpush.msra.mxu0 0.0
    %803 = vmatpush.msra.mxu0 0.0
    %804 = vmatpush.msra.mxu0 0.0
    %805 = vmatpush.msra.mxu0 0.0
    %806 = vmatpush.msra.mxu0 0.0
    %807 = vmatpush.msra.mxu0 0.0
    %808 = vmatpush.msra.mxu0 0.0
    %809 = vmatpush.msra.mxu0 0.0
    %810 = vmatpush.msra.mxu0 0.0
    %811 = vmatpush.msra.mxu0 0.0
    %812 = vmatpush.msra.mxu0 0.0
    %813 = vmatpush.msra.mxu0 %v751
    %814 = vmatmul.f32.gmra.mxu0 %v756
    %v815 = vpop.f32.mrf.mxu0
    %v816 = vadd.f32 %v796, %v815
    %817 = vdwg.mxu0
    %818 = vmatpush.msra.mxu0 %v718
    %819 = vmatpush.msra.mxu0 %v716
    %820 = vmatpush.msra.mxu0 %v714
    %821 = vmatpush.msra.mxu0 %v712
    %822 = vmatpush.msra.mxu0 %v710
    %823 = vmatpush.msra.mxu0 %v708
    %824 = vmatpush.msra.mxu0 %v706
    %825 = vmatpush.msra.mxu0 %v704
    %826 = vmatpush.msra.mxu0 %v702
    %827 = vmatpush.msra.mxu0 %v700
    %828 = vmatpush.msra.mxu0 %v698
    %829 = vmatpush.msra.mxu0 %v696
    %830 = vmatpush.msra.mxu0 %v694
    %831 = vmatpush.msra.mxu0 %v692
    %832 = vmatpush.msra.mxu0 %v690
    %833 = vmatpush.msra.mxu0 %v688
    %834 = vmatmul.f32.gmra.mxu0 %v684
    %v835 = vpop.f32.mrf.mxu0
    %v836 = vadd.f32 %v754, %v835
    %837 = vdwg.mxu0
    %838 = vmatpush.msra.mxu0 %v750
    %839 = vmatpush.msra.mxu0 %v748
    %840 = vmatpush.msra.mxu0 %v746
    %841 = vmatpush.msra.mxu0 %v744
    %842 = vmatpush.msra.mxu0 %v742
    %843 = vmatpush.msra.mxu0 %v740
    %844 = vmatpush.msra.mxu0 %v738
    %845 = vmatpush.msra.mxu0 %v736
    %846 = vmatpush.msra.mxu0 %v734
    %847 = vmatpush.msra.mxu0 %v732
    %848 = vmatpush.msra.mxu0 %v730
    %849 = vmatpush.msra.mxu0 %v728
    %850 = vmatpush.msra.mxu0 %v726
    %851 = vmatpush.msra.mxu0 %v724
    %852 = vmatpush.msra.mxu0 %v722
    %853 = vmatpush.msra.mxu0 %v720
    %854 = vmatmul.f32.gmra.mxu0 %v685
    %v855 = vpop.f32.mrf.mxu0
    %v856 = vadd.f32 %v836, %v855
    %857 = vdwg.mxu0
    %858 = vmatpush.msra.mxu0 0.0
    %859 = vmatpush.msra.mxu0 0.0
    %860 = vmatpush.msra.mxu0 0.0
    %861 = vmatpush.msra.mxu0 0.0
    %862 = vmatpush.msra.mxu0 0.0
    %863 = vmatpush.msra.mxu0 0.0
    %864 = vmatpush.msra.mxu0 0.0
    %865 = vmatpush.msra.mxu0 0.0
    %866 = vmatpush.msra.mxu0 0.0
    %867 = vmatpush.msra.mxu0 0.0
    %868 = vmatpush.msra.mxu0 0.0
    %869 = vmatpush.msra.mxu0 0.0
    %870 = vmatpush.msra.mxu0 0.0
    %871 = vmatpush.msra.mxu0 0.0
    %872 = vmatpush.msra.mxu0 0.0
    %873 = vmatpush.msra.mxu0 %v752
    %874 = vmatmul.f32.gmra.mxu0 %v756
    %v875 = vpop.f32.mrf.mxu0
    %v876 = vadd.f32 %v856, %v875
    %877 = vdwg.mxu0
    %v878 = vmax.f32 %v816, 0.0
    %v879 = vmax.f32 %v876, 0.0
    %881 = vset.pattern.permute.xlu0 0
    %882 = vperm.xlu0 %881, %v172
    %v883 = vpop.permute.xlu0 %882
    %v885 = vadd.f32 %v362, %v883
    %v886 = vadd.f32 %v363, %v883
    %887 = vst.msk [vmem:[%s12] sm:$0xff] %vm53, %v885
    %888 = vst.msk [vmem:[%s12 + $0x8] sm:$0xff] %vm53, %v886
    %v889 = vadd.f32 %v878, %v172
    %v890 = vadd.f32 %v879, %v172
    %891 = vst [vmem:[#allocation2] sm:$0xff] %v889
    %892 = vst.msk [vmem:[#allocation2 + $0x8] sm:$0xff] %vm406, %v890
    %vm893 = vcmp.gt.f32.partialorder %v97, %v147
    %v894 = vsub.f32 %v79, %v147
    %v895 = vrcp.pop %v94
    %v896 = vmul.f32 %v94, %v895
    %v897 = vsub.f32 1.0, %v896
    %v898 = vmul.f32 %v895, %v897
    %v899 = vadd.f32 %v895, %v898
    %vm900 = vweird.f32 %v94
    %vm901 = vweird.f32 %v895
    %vm902 = vmor %vm900, %vm901
    %v903 = vsel %vm902, %v895, %v899
    %v904 = vand.u32 2147483647, %v94
    %vm905 = vcmp.eq.f32.partialorder %v904, 8.507059e+37
    %v906 = vand.u32 %v94, 2147483648
    %v907 = vor.u32 1.1754944e-38, %v906
    %v908 = vsel %vm905, %v907, %v903
    %v909 = vmul.f32 %v894, %v908
    %v910 = vmul.f32 %v909, 0.70710677
    %v911 = vand.u32 2147483647, %v910
    %v912 = vmul.f32 %v911, 0.3275911
    %v913 = vadd.f32 %v912, 1.0
    %v914 = vrcp.pop %v913
    %v915 = vmul.f32 %v913, %v914
    %v916 = vsub.f32 1.0, %v915
    %v917 = vmul.f32 %v914, %v916
    %v918 = vadd.f32 %v914, %v917
    %vm919 = vweird.f32 %v913
    %vm920 = vweird.f32 %v914
    %vm921 = vmor %vm919, %vm920
    %v922 = vsel %vm921, %v914, %v918
    %v923 = vand.u32 2147483647, %v913
    %vm924 = vcmp.eq.f32.partialorder %v923, 8.507059e+37
    %v925 = vand.u32 %v913, 2147483648
    %v926 = vor.u32 1.1754944e-38, %v925
    %v927 = vsel %vm924, %v926, %v922
    %v928 = vmul.f32 1.0, %v927
    %v929 = vmul.f32 %v928, 1.0614054
    %v930 = vadd.f32 %v929, -1.4531521
    %v931 = vmul.f32 %v928, %v930
    %v932 = vadd.f32 %v931, 1.4214138
    %v933 = vmul.f32 %v928, %v932
    %v934 = vadd.f32 %v933, -0.28449672
    %v935 = vmul.f32 %v928, %v934
    %v936 = vadd.f32 %v935, 0.2548296
    %v937 = vmul.f32 %v928, %v936
    %v938 = vsub.f32 0.0, %v911
    %v939 = vmul.f32 %v938, %v911
    %v940 = vmul.f32 %v939, 1.442695
    %v941 = vpow.pop %v940
    %v942 = vmul.f32 %v937, %v941
    %v943 = vsub.f32 1.0, %v942
    %vm944 = vcmp.lt.f32.partialorder %v910, 0.0
    %v945 = vsub.f32 0.0, %v943
    %v946 = vsel %vm944, %v945, %v943
    %v947 = vadd.f32 %v946, 1.0
    %v948 = vmul.f32 %v947, 0.5
    %v949 = vsub.f32 %v79, %v125
    %v950 = vmul.f32 %v949, %v908
    %v951 = vmul.f32 %v950, 0.70710677
    %v952 = vand.u32 2147483647, %v951
    %v953 = vmul.f32 %v952, 0.3275911
    %v954 = vadd.f32 %v953, 1.0
    %v955 = vrcp.pop %v954
    %v956 = vmul.f32 %v954, %v955
    %v957 = vsub.f32 1.0, %v956
    %v958 = vmul.f32 %v955, %v957
    %v959 = vadd.f32 %v955, %v958
    %vm960 = vweird.f32 %v954
    %vm961 = vweird.f32 %v955
    %vm962 = vmor %vm960, %vm961
    %v963 = vsel %vm962, %v955, %v959
    %v964 = vand.u32 2147483647, %v954
    %vm965 = vcmp.eq.f32.partialorder %v964, 8.507059e+37
    %v966 = vand.u32 %v954, 2147483648
    %v967 = vor.u32 1.1754944e-38, %v966
    %v968 = vsel %vm965, %v967, %v963
    %v969 = vmul.f32 1.0, %v968
    %v970 = vmul.f32 %v969, 1.0614054
    %v971 = vadd.f32 %v970, -1.4531521
    %v972 = vmul.f32 %v969, %v971
    %v973 = vadd.f32 %v972, 1.4214138
    %v974 = vmul.f32 %v969, %v973
    %v975 = vadd.f32 %v974, -0.28449672
    %v976 = vmul.f32 %v969, %v975
    %v977 = vadd.f32 %v976, 0.2548296
    %v978 = vmul.f32 %v969, %v977
    %v979 = vsub.f32 0.0, %v952
    %v980 = vmul.f32 %v979, %v952
    %v981 = vmul.f32 %v980, 1.442695
    %v982 = vpow.pop %v981
    %v983 = vmul.f32 %v978, %v982
    %v984 = vsub.f32 1.0, %v983
    %vm985 = vcmp.lt.f32.partialorder %v951, 0.0
    %v986 = vsub.f32 0.0, %v984
    %v987 = vsel %vm985, %v986, %v984
    %v988 = vadd.f32 %v987, 1.0
    %v989 = vmul.f32 %v988, 0.5
    %v990 = vsel %vm893, %v948, %v989
    %v991 = vsel %vm100, %v990, 0.0
    %v992 = vrot.slane %v991, 4
    %v993 = vadd.f32 %v991, %v992
    %v994 = vrot.slane %v993, 2
    %v995 = vadd.f32 %v993, %v994
    %v996 = vrot.slane %v995, 1
    %v997 = vadd.f32 %v995, %v996
    %v998 = vsel %vm100, %v164, 0.0
    %999 = vadd.xlane.f32.xlu0 %v998
    %v1000 = vpop.xlane.xlu0 %999
    %v1001 = vmul.f32 %v1000, 0.125
    %v1002 = vsub.f32 %v164, %v1001
    %v1003 = vmul.f32 %v1002, %v1002
    %v1004 = vsel %vm100, %v1003, 0.0
    %1005 = vadd.xlane.f32.xlu0 %v1004
    %v1006 = vpop.xlane.xlu0 %1005
    %v1007 = vmul.f32 %v1006, 0.14285715
    %v1008 = vmul.f32 %v1001, %v1001
    %v1009 = vadd.f32 %v1008, 1e-10
    %v1010 = vrcp.pop %v1009
    %v1011 = vmul.f32 %v1009, %v1010
    %v1012 = vsub.f32 1.0, %v1011
    %v1013 = vmul.f32 %v1010, %v1012
    %v1014 = vadd.f32 %v1010, %v1013
    %vm1015 = vweird.f32 %v1009
    %vm1016 = vweird.f32 %v1010
    %vm1017 = vmor %vm1015, %vm1016
    %v1018 = vsel %vm1017, %v1010, %v1014
    %v1019 = vand.u32 2147483647, %v1009
    %vm1020 = vcmp.eq.f32.partialorder %v1019, 8.507059e+37
    %v1021 = vand.u32 %v1009, 2147483648
    %v1022 = vor.u32 1.1754944e-38, %v1021
    %v1023 = vsel %vm1020, %v1022, %v1018
    %v1024 = vmul.f32 %v1007, %v1023
    %v1025 = vsel %vm100, %v997, 0.0
    %1026 = vadd.xlane.f32.xlu0 %v1025
    %v1027 = vpop.xlane.xlu0 %1026
    %v1028 = vmul.f32 %v1027, 0.125
    %v1029 = vsub.f32 %v997, %v1028
    %v1030 = vmul.f32 %v1029, %v1029
    %v1031 = vsel %vm100, %v1030, 0.0
    %1032 = vadd.xlane.f32.xlu0 %v1031
    %v1033 = vpop.xlane.xlu0 %1032
    %v1034 = vmul.f32 %v1033, 0.14285715
    %v1035 = vmul.f32 %v1028, %v1028
    %v1036 = vadd.f32 %v1035, 1e-10
    %v1037 = vrcp.pop %v1036
    %v1038 = vmul.f32 %v1036, %v1037
    %v1039 = vsub.f32 1.0, %v1038
    %v1040 = vmul.f32 %v1037, %v1039
    %v1041 = vadd.f32 %v1037, %v1040
    %vm1042 = vweird.f32 %v1036
    %vm1043 = vweird.f32 %v1037
    %vm1044 = vmor %vm1042, %vm1043
    %v1045 = vsel %vm1044, %v1037, %v1041
    %v1046 = vand.u32 2147483647, %v1036
    %vm1047 = vcmp.eq.f32.partialorder %v1046, 8.507059e+37
    %v1048 = vand.u32 %v1036, 2147483648
    %v1049 = vor.u32 1.1754944e-38, %v1048
    %v1050 = vsel %vm1047, %v1049, %v1045
    %v1051 = vmul.f32 %v1034, %v1050
    %v1052 = vadd.f32 %v1024, %v1051
    %v1053 = vmul.f32 %v1052, 0.01
    %vm1054 = vcmask 0
    %1055 = vst.msk [vmem:[#allocation4] sm:$0x1] %vm1054, %v1053
    // Predicated region
    $region50: #{moe_forward.1} parent=1 // pred_check
      _
    $region51: #{moe_forward.1} parent=1 // pred_check_branch
      %1057 = sbr.rel (0) target = $region53
    $region52: #{moe_forward.1} parent=1 // pred_region
      _
    $region53: #{moe_forward.1} parent=1 // pred_fallthru
      _
    // Predicated region
    $region54: #{moe_forward.1} parent=1 // pred_check
      _
    $region55: #{moe_forward.1} parent=1 // pred_check_branch
      %1059 = sbr.rel (0) target = $region57
    $region56: #{moe_forward.1} parent=1 // pred_region
      %1061 = vsyncadd [#allocation3], 0
      %s1063 = sshll.u32 [#allocation2], 4
      %s1064 = int_to_ptr.vmem [resolvable:$true] %s1063
      %s1065 = sshll.u32 %s13, 4
      %s1066 = int_to_ptr.hbm [resolvable:$true] %s1065
      %1068 = dma.vmem_to_hbm [thread:$0]  %s1064, 256, %s1066, [#allocation3]
    $region57: #{moe_forward.1} parent=1 // pred_fallthru
      _
    // Predicated region
    $region58: #{moe_forward.1} parent=1 // pred_check
      _
    $region59: #{moe_forward.1} parent=1 // pred_check_branch
      %1070 = sbr.rel (0) target = $region61
    $region60: #{moe_forward.1} parent=1 // pred_region
      %1072 = vsyncadd [#allocation5], 0
      %s1074 = sshll.u32 [#allocation4], 4
      %s1075 = int_to_ptr.vmem [resolvable:$true] %s1074
      %s1076 = sshll.u32 %s14, 4
      %s1077 = int_to_ptr.hbm [resolvable:$true] %s1076
      %1079 = dma.vmem_to_hbm [thread:$0]  %s1075, 16, %s1077, [#allocation5]
    $region61: #{moe_forward.1} parent=1 // pred_fallthru
      _
    // Predicated region
    $region62: #{moe_forward.1} parent=1 // pred_check
      _
    $region63: #{moe_forward.1} parent=1 // pred_check_branch
      %1081 = sbr.rel (0) target = $region65
    $region64: #{moe_forward.1} parent=1 // pred_region
      _
    $region65: #{moe_forward.1} parent=1 // pred_fallthru
      _
    // Predicated region
    $region66: #{moe_forward.1} parent=1 // pred_check
      _
    $region67: #{moe_forward.1} parent=1 // pred_check_branch
      %1083 = sbr.rel (0) target = $region69
    $region68: #{moe_forward.1} parent=1 // pred_region
      %1085 = dma.done [#allocation3], 256
    $region69: #{moe_forward.1} parent=1 // pred_fallthru
      _
    // Predicated region
    $region70: #{moe_forward.1} parent=1 // pred_check
      _
    $region71: #{moe_forward.1} parent=1 // pred_check_branch
      %1087 = sbr.rel (0) target = $region73
    $region72: #{moe_forward.1} parent=1 // pred_region
      %1089 = dma.done [#allocation5], 16
    $region73: #{moe_forward.1} parent=1 // pred_fallthru
      _
    %1090 = vsyncpa [#allocation3], 1
    %1091 = vsyncpa [#allocation5], 1

</llo_original>
